<compile_context>
chip_gen: v7x
topology: tpu7x:2x2x1
jax: 0.10.0
libtpu: 0.0.40
codegen_flags: <defaults>
</compile_context>

<pallas_src>
import functools

import jax
import jax.numpy as jnp
from jax import lax
from jax.experimental import pallas as pl
from jax.experimental.pallas import tpu as pltpu


# -----------------------------------------------------------------------------
# Kernel
# -----------------------------------------------------------------------------
def _shift_flat(x, s):
    """out[:, p] = x[:, p + s] along the flattened H*W (lane) axis, zero-filled OOB."""
    C, HW = x.shape
    if s > 0:
        return jnp.concatenate([x[:, s:], jnp.zeros((C, s), x.dtype)], axis=1)
    if s < 0:
        return jnp.concatenate([jnp.zeros((C, -s), x.dtype), x[:, : HW + s]], axis=1)
    return x


def se_bottleneck_kernel(H, W,
                         x_ref,
                         w1_ref, s1_ref, b1_ref,
                         w2_ref, s2_ref, b2_ref,
                         w3_ref, s3_ref, b3_ref,
                         wse1_ref, wse2_ref,
                         mask_l_ref, mask_r_ref,
                         o_ref):
    HW = H * W
    x = x_ref[0].astype(jnp.float32)                       # (Cin, HW), lane-dense

    # ---- stage 1: 1x1 conv + folded BN + ReLU -------------------------------
    h1 = jnp.dot(w1_ref[...], x, preferred_element_type=jnp.float32)   # (Cm, HW)
    h1 = jnp.maximum(h1 * s1_ref[...] + b1_ref[...], 0.0)

    # ---- stage 2: 3x3 conv (pad=1, stride=1) + folded BN + ReLU -------------
    # 9 taps = lane-shift of the flattened map + column mask + (Cm,Cm)@(Cm,HW).
    mask_l = mask_l_ref[...]                                # valid where x-1 >= 0
    mask_r = mask_r_ref[...]                                # valid where x+1 <  W
    acc = jnp.zeros_like(h1)
    for ky in range(3):
        for kx in range(3):
            ddy, ddx = ky - 1, kx - 1
            xs = _shift_flat(h1, ddy * W + ddx)
            if ddx == 1:
                xs = xs * mask_r
            elif ddx == -1:
                xs = xs * mask_l
            acc = acc + jnp.dot(w2_ref[ky * 3 + kx], xs,
                                preferred_element_type=jnp.float32)
    h2 = jnp.maximum(acc * s2_ref[...] + b2_ref[...], 0.0)  # (Cm, HW)

    # ---- stage 3: 1x1 conv + folded BN (SE fused into this epilogue) --------
    h3 = jnp.dot(w3_ref[...], h2, preferred_element_type=jnp.float32)  # (Cout, HW)
    h3 = h3 * s3_ref[...] + b3_ref[...]

    # ---- SE: squeeze (global mean) + excitation (column vectors) ------------
    y = jnp.sum(h3, axis=1, keepdims=True) * (1.0 / HW)     # (Cout, 1)
    e = jnp.maximum(jnp.dot(wse1_ref[...], y,
                            preferred_element_type=jnp.float32), 0.0)  # (Cr, 1)
    g = jax.nn.sigmoid(jnp.dot(wse2_ref[...], e,
                               preferred_element_type=jnp.float32))    # (Cout, 1)

    # ---- per-channel scale + final ReLU (no residual add in the reference) --
    o_ref[0] = jnp.maximum(h3 * g, 0.0).astype(o_ref.dtype)


# -----------------------------------------------------------------------------
# Wrapper
# -----------------------------------------------------------------------------
def fold_bn(gamma, beta, mean, var, eps=1e-5):
    scale = gamma * lax.rsqrt(var + eps)
    bias = beta - mean * scale
    return scale, bias


def se_bottleneck(x, params, eps=1e-5):
    """x: (B, Cin, H, W). params: PyTorch-layout weights + BN running stats."""
    B, Cin, H, W = x.shape
    HW = H * W

    w1 = params["conv1_w"].reshape(params["conv1_w"].shape[0], Cin)     # (Cm, Cin)
    Cm = w1.shape[0]
    w2_taps = jnp.transpose(params["conv2_w"], (2, 3, 0, 1)).reshape(9, Cm, Cm)
    w3 = params["conv3_w"].reshape(params["conv3_w"].shape[0], Cm)      # (Cout, Cm)
    Cout = w3.shape[0]
    wse1 = params["se_w1"]                                              # (Cr, Cout)
    wse2 = params["se_w2"]                                              # (Cout, Cr)
    Cr = wse1.shape[0]

    s1, b1 = fold_bn(params["bn1_g"], params["bn1_b"], params["bn1_m"], params["bn1_v"], eps)
    s2, b2 = fold_bn(params["bn2_g"], params["bn2_b"], params["bn2_m"], params["bn2_v"], eps)
    s3, b3 = fold_bn(params["bn3_g"], params["bn3_b"], params["bn3_m"], params["bn3_v"], eps)
    _col = lambda v: v.reshape(-1, 1).astype(jnp.float32)

    # Precomputed column-boundary masks for the 3x3 taps (keeps the kernel free
    # of integer iota/mod ops): valid positions for dx = -1 / dx = +1 shifts.
    xcol = jnp.arange(HW, dtype=jnp.int32) % W
    mask_l = (xcol >= 1).astype(jnp.float32).reshape(1, HW)
    mask_r = (xcol <= W - 2).astype(jnp.float32).reshape(1, HW)

    x_flat = x.reshape(B, Cin, HW)
    const = lambda *_: tuple(0 for _ in range(_[0]))  # unused; keep explicit lambdas below

    out = pl.pallas_call(
        functools.partial(se_bottleneck_kernel, H, W),
        out_shape=jax.ShapeDtypeStruct((B, Cout, HW), x.dtype),
        grid_spec=pltpu.PrefetchScalarGridSpec(
            num_scalar_prefetch=0,
            grid=(B,),
            in_specs=[
                pl.BlockSpec((1, Cin, HW), lambda b: (b, 0, 0)),
                # Constant index_maps -> each weight is DMA'd once for the grid.
                pl.BlockSpec((Cm, Cin), lambda b: (0, 0)),
                pl.BlockSpec((Cm, 1), lambda b: (0, 0)),
                pl.BlockSpec((Cm, 1), lambda b: (0, 0)),
                pl.BlockSpec((9, Cm, Cm), lambda b: (0, 0, 0)),
                pl.BlockSpec((Cm, 1), lambda b: (0, 0)),
                pl.BlockSpec((Cm, 1), lambda b: (0, 0)),
                pl.BlockSpec((Cout, Cm), lambda b: (0, 0)),
                pl.BlockSpec((Cout, 1), lambda b: (0, 0)),
                pl.BlockSpec((Cout, 1), lambda b: (0, 0)),
                pl.BlockSpec((Cr, Cout), lambda b: (0, 0)),
                pl.BlockSpec((Cout, Cr), lambda b: (0, 0)),
                pl.BlockSpec((1, HW), lambda b: (0, 0)),
                pl.BlockSpec((1, HW), lambda b: (0, 0)),
            ],
            out_specs=pl.BlockSpec((1, Cout, HW), lambda b: (b, 0, 0)),
        ),
        compiler_params=pltpu.CompilerParams(
            dimension_semantics=("parallel",),   # >= 2 parallel steps for v7x dual-TC
        ),
    )(
        x_flat,
        w1.astype(jnp.float32), _col(s1), _col(b1),
        w2_taps.astype(jnp.float32), _col(s2), _col(b2),
        w3.astype(jnp.float32), _col(s3), _col(b3),
        wse1.astype(jnp.float32), wse2.astype(jnp.float32),
        mask_l, mask_r,
    )
    return out.reshape(B, Cout, H, W)


# -----------------------------------------------------------------------------
# Pure-JAX reference (matches the PyTorch forward, eval-mode BN)
# -----------------------------------------------------------------------------
def _bn_nchw(z, gamma, beta, mean, var, eps):
    scale, bias = fold_bn(gamma, beta, mean, var, eps)
    return z * scale[None, :, None, None] + bias[None, :, None, None]


def se_bottleneck_ref(x, p, eps=1e-5):
    hi = lax.Precision.HIGHEST
    out = jnp.einsum("oi,bihw->bohw", p["conv1_w"][:, :, 0, 0], x, precision=hi)
    out = jnp.maximum(_bn_nchw(out, p["bn1_g"], p["bn1_b"], p["bn1_m"], p["bn1_v"], eps), 0.0)
    out = lax.conv_general_dilated(
        out, p["conv2_w"], window_strides=(1, 1), padding=((1, 1), (1, 1)),
        dimension_numbers=("NCHW", "OIHW", "NCHW"), precision=hi)
    out = jnp.maximum(_bn_nchw(out, p["bn2_g"], p["bn2_b"], p["bn2_m"], p["bn2_v"], eps), 0.0)
    out = jnp.einsum("oi,bihw->bohw", p["conv3_w"][:, :, 0, 0], out, precision=hi)
    out = _bn_nchw(out, p["bn3_g"], p["bn3_b"], p["bn3_m"], p["bn3_v"], eps)
    y = out.mean(axis=(2, 3))                          # squeeze          (B, Cout)
    h = jnp.maximum(y @ p["se_w1"].T, 0.0)             # Linear + ReLU    (B, Cr)
    s = jax.nn.sigmoid(h @ p["se_w2"].T)               # Linear + Sigmoid (B, Cout)
    return jnp.maximum(out * s[:, :, None, None], 0.0)


# -----------------------------------------------------------------------------
if __name__ == "__main__":
    # SEBottleneck(inplanes=32, planes=16, r=4): width = 16, out channels = 64.
    B, Cin, H, W = 2, 32, 16, 16
    planes, expansion, r = 16, 4, 4
    Cm = planes                 # width (base_width=64, groups=1)
    Cout = planes * expansion   # 64
    Cr = Cout // r              # 16

    keys = jax.random.split(jax.random.PRNGKey(0), 20)
    x = jax.random.normal(keys[0], (B, Cin, H, W), dtype=jnp.float32)

    def nrm(k, shape, scale=0.1):
        return scale * jax.random.normal(k, shape, dtype=jnp.float32)

    params = {
        "conv1_w": nrm(keys[1], (Cm, Cin, 1, 1)),
        "conv2_w": nrm(keys[2], (Cm, Cm, 3, 3)),
        "conv3_w": nrm(keys[3], (Cout, Cm, 1, 1)),
        "bn1_g": jax.random.uniform(keys[4], (Cm,), jnp.float32, 0.5, 1.5),
        "bn1_b": nrm(keys[5], (Cm,)),
        "bn1_m": nrm(keys[6], (Cm,)),
        "bn1_v": jax.random.uniform(keys[7], (Cm,), jnp.float32, 0.5, 1.5),
        "bn2_g": jax.random.uniform(keys[8], (Cm,), jnp.float32, 0.5, 1.5),
        "bn2_b": nrm(keys[9], (Cm,)),
        "bn2_m": nrm(keys[10], (Cm,)),
        "bn2_v": jax.random.uniform(keys[11], (Cm,), jnp.float32, 0.5, 1.5),
        "bn3_g": jax.random.uniform(keys[12], (Cout,), jnp.float32, 0.5, 1.5),
        "bn3_b": nrm(keys[13], (Cout,)),
        "bn3_m": nrm(keys[14], (Cout,)),
        "bn3_v": jax.random.uniform(keys[15], (Cout,), jnp.float32, 0.5, 1.5),
        "se_w1": nrm(keys[16], (Cr, Cout)),    # nn.Linear(Cout, Cr).weight
        "se_w2": nrm(keys[17], (Cout, Cr)),    # nn.Linear(Cr, Cout).weight
    }

    out = jax.block_until_ready(se_bottleneck(x, params))
    ref = se_bottleneck_ref(x, params)
    err = float(jnp.max(jnp.abs(out - ref)))
    assert out.shape == (B, Cout, H, W)
    assert jnp.allclose(out, ref, atol=2e-3, rtol=2e-2), f"mismatch vs reference (max abs err {err})"
    print("KERNEL_OK")
</pallas_src>

<mosaic_0001>
module attributes {stable_mosaic.version = 11 : i64} {
  func.func @se_bottleneck_kernel(%arg0: i32, %arg1: memref<1x32x256xf32, #tpu.memory_space<vmem>>, %arg2: memref<16x32xf32, #tpu.memory_space<vmem>>, %arg3: memref<16x1xf32, #tpu.memory_space<vmem>>, %arg4: memref<16x1xf32, #tpu.memory_space<vmem>>, %arg5: memref<9x16x16xf32, #tpu.memory_space<vmem>>, %arg6: memref<16x1xf32, #tpu.memory_space<vmem>>, %arg7: memref<16x1xf32, #tpu.memory_space<vmem>>, %arg8: memref<64x16xf32, #tpu.memory_space<vmem>>, %arg9: memref<64x1xf32, #tpu.memory_space<vmem>>, %arg10: memref<64x1xf32, #tpu.memory_space<vmem>>, %arg11: memref<16x64xf32, #tpu.memory_space<vmem>>, %arg12: memref<64x16xf32, #tpu.memory_space<vmem>>, %arg13: memref<1x256xf32, #tpu.memory_space<vmem>>, %arg14: memref<1x256xf32, #tpu.memory_space<vmem>>, %arg15: memref<1x64x256xf32, #tpu.memory_space<vmem>>) attributes {dimension_semantics = [#tpu.dimension_semantics<parallel>], iteration_bounds = array<i64: 2>, scalar_prefetch = 0 : i64, scratch_operands = 0 : i64, tpu.core_type = #tpu.core_type<tc>, window_params = [{transform_indices = @transform_0, window_bounds = array<i64: 1, 32, 256>}, {pipeline_mode = #tpu.pipeline_mode<synchronous>, transform_indices = @transform_1, window_bounds = array<i64: 16, 32>}, {pipeline_mode = #tpu.pipeline_mode<synchronous>, transform_indices = @transform_2, window_bounds = array<i64: 16, 1>}, {pipeline_mode = #tpu.pipeline_mode<synchronous>, transform_indices = @transform_3, window_bounds = array<i64: 16, 1>}, {pipeline_mode = #tpu.pipeline_mode<synchronous>, transform_indices = @transform_4, window_bounds = array<i64: 9, 16, 16>}, {pipeline_mode = #tpu.pipeline_mode<synchronous>, transform_indices = @transform_5, window_bounds = array<i64: 16, 1>}, {pipeline_mode = #tpu.pipeline_mode<synchronous>, transform_indices = @transform_6, window_bounds = array<i64: 16, 1>}, {pipeline_mode = #tpu.pipeline_mode<synchronous>, transform_indices = @transform_7, window_bounds = array<i64: 64, 16>}, {pipeline_mode = #tpu.pipeline_mode<synchronous>, transform_indices = @transform_8, window_bounds = array<i64: 64, 1>}, {pipeline_mode = #tpu.pipeline_mode<synchronous>, transform_indices = @transform_9, window_bounds = array<i64: 64, 1>}, {pipeline_mode = #tpu.pipeline_mode<synchronous>, transform_indices = @transform_10, window_bounds = array<i64: 16, 64>}, {pipeline_mode = #tpu.pipeline_mode<synchronous>, transform_indices = @transform_11, window_bounds = array<i64: 64, 16>}, {pipeline_mode = #tpu.pipeline_mode<synchronous>, transform_indices = @transform_12, window_bounds = array<i64: 1, 256>}, {pipeline_mode = #tpu.pipeline_mode<synchronous>, transform_indices = @transform_13, window_bounds = array<i64: 1, 256>}, {transform_indices = @transform_14, window_bounds = array<i64: 1, 64, 256>}]} {
    %c0 = arith.constant 0 : index
    %c0_0 = arith.constant 0 : index
    %c0_1 = arith.constant 0 : index
    %0 = vector.load %arg1[%c0, %c0_0, %c0_1] : memref<1x32x256xf32, #tpu.memory_space<vmem>>, vector<1x32x256xf32>
    %1 = vector.shape_cast %0 : vector<1x32x256xf32> to vector<32x256xf32>
    %c0_2 = arith.constant 0 : index
    %c0_3 = arith.constant 0 : index
    %2 = vector.load %arg2[%c0_2, %c0_3] : memref<16x32xf32, #tpu.memory_space<vmem>>, vector<16x32xf32>
    %cst = arith.constant dense<0.000000e+00> : vector<16x256xf32>
    %3 = tpu.matmul %2, %1, %cst {dimension_numbers = #tpu.dot_dimension_numbers<[1], [0], [0], [1], [0, 0, 1, 1], [], []>} : vector<16x32xf32>, vector<32x256xf32>, vector<16x256xf32> -> vector<16x256xf32>
    %c0_4 = arith.constant 0 : index
    %c0_5 = arith.constant 0 : index
    %4 = vector.load %arg3[%c0_4, %c0_5] : memref<16x1xf32, #tpu.memory_space<vmem>>, vector<16x1xf32>
    %5 = vector.broadcast %4 : vector<16x1xf32> to vector<16x256xf32>
    %6 = arith.mulf %3, %5 : vector<16x256xf32>
    %c0_6 = arith.constant 0 : index
    %c0_7 = arith.constant 0 : index
    %7 = vector.load %arg4[%c0_6, %c0_7] : memref<16x1xf32, #tpu.memory_space<vmem>>, vector<16x1xf32>
    %8 = vector.broadcast %7 : vector<16x1xf32> to vector<16x256xf32>
    %9 = arith.addf %6, %8 : vector<16x256xf32>
    %cst_8 = arith.constant 0.000000e+00 : f32
    %10 = vector.broadcast %cst_8 : f32 to vector<16x256xf32>
    %11 = arith.maximumf %9, %10 : vector<16x256xf32>
    %c0_9 = arith.constant 0 : index
    %c0_10 = arith.constant 0 : index
    %12 = vector.load %arg13[%c0_9, %c0_10] : memref<1x256xf32, #tpu.memory_space<vmem>>, vector<1x256xf32>
    %c0_11 = arith.constant 0 : index
    %c0_12 = arith.constant 0 : index
    %13 = vector.load %arg14[%c0_11, %c0_12] : memref<1x256xf32, #tpu.memory_space<vmem>>, vector<1x256xf32>
    %cst_13 = arith.constant 0.000000e+00 : f32
    %14 = vector.broadcast %cst_13 : f32 to vector<16x256xf32>
    %cst_14 = arith.constant 0.000000e+00 : f32
    %15 = vector.broadcast %cst_14 : f32 to vector<16x17xf32>
    %16 = vector.extract_strided_slice %11 {offsets = [0, 0], sizes = [16, 239], strides = [1, 1]} : vector<16x256xf32> to vector<16x239xf32>
    %17 = tpu.concatenate %15, %16 in 1 : vector<16x17xf32>, vector<16x239xf32> -> vector<16x256xf32>
    %18 = vector.broadcast %12 : vector<1x256xf32> to vector<16x256xf32>
    %19 = arith.mulf %17, %18 : vector<16x256xf32>
    %c0_15 = arith.constant 0 : index
    %c0_16 = arith.constant 0 : index
    %c0_17 = arith.constant 0 : index
    %20 = vector.load %arg5[%c0_15, %c0_16, %c0_17] : memref<9x16x16xf32, #tpu.memory_space<vmem>>, vector<1x16x16xf32>
    %21 = vector.shape_cast %20 : vector<1x16x16xf32> to vector<16x16xf32>
    %cst_18 = arith.constant dense<0.000000e+00> : vector<16x256xf32>
    %22 = tpu.matmul %21, %19, %cst_18 {dimension_numbers = #tpu.dot_dimension_numbers<[1], [0], [0], [1], [0, 0, 1, 1], [], []>} : vector<16x16xf32>, vector<16x256xf32>, vector<16x256xf32> -> vector<16x256xf32>
    %23 = arith.addf %14, %22 : vector<16x256xf32>
    %cst_19 = arith.constant 0.000000e+00 : f32
    %24 = vector.broadcast %cst_19 : f32 to vector<16x16xf32>
    %25 = vector.extract_strided_slice %11 {offsets = [0, 0], sizes = [16, 240], strides = [1, 1]} : vector<16x256xf32> to vector<16x240xf32>
    %26 = tpu.concatenate %24, %25 in 1 : vector<16x16xf32>, vector<16x240xf32> -> vector<16x256xf32>
    %c1 = arith.constant 1 : index
    %c0_20 = arith.constant 0 : index
    %c0_21 = arith.constant 0 : index
    %27 = vector.load %arg5[%c1, %c0_20, %c0_21] : memref<9x16x16xf32, #tpu.memory_space<vmem>>, vector<1x16x16xf32>
    %28 = vector.shape_cast %27 : vector<1x16x16xf32> to vector<16x16xf32>
    %cst_22 = arith.constant dense<0.000000e+00> : vector<16x256xf32>
    %29 = tpu.matmul %28, %26, %cst_22 {dimension_numbers = #tpu.dot_dimension_numbers<[1], [0], [0], [1], [0, 0, 1, 1], [], []>} : vector<16x16xf32>, vector<16x256xf32>, vector<16x256xf32> -> vector<16x256xf32>
    %30 = arith.addf %23, %29 : vector<16x256xf32>
    %cst_23 = arith.constant 0.000000e+00 : f32
    %31 = vector.broadcast %cst_23 : f32 to vector<16x15xf32>
    %32 = vector.extract_strided_slice %11 {offsets = [0, 0], sizes = [16, 241], strides = [1, 1]} : vector<16x256xf32> to vector<16x241xf32>
    %33 = tpu.concatenate %31, %32 in 1 : vector<16x15xf32>, vector<16x241xf32> -> vector<16x256xf32>
    %34 = vector.broadcast %13 : vector<1x256xf32> to vector<16x256xf32>
    %35 = arith.mulf %33, %34 : vector<16x256xf32>
    %c2 = arith.constant 2 : index
    %c0_24 = arith.constant 0 : index
    %c0_25 = arith.constant 0 : index
    %36 = vector.load %arg5[%c2, %c0_24, %c0_25] : memref<9x16x16xf32, #tpu.memory_space<vmem>>, vector<1x16x16xf32>
    %37 = vector.shape_cast %36 : vector<1x16x16xf32> to vector<16x16xf32>
    %cst_26 = arith.constant dense<0.000000e+00> : vector<16x256xf32>
    %38 = tpu.matmul %37, %35, %cst_26 {dimension_numbers = #tpu.dot_dimension_numbers<[1], [0], [0], [1], [0, 0, 1, 1], [], []>} : vector<16x16xf32>, vector<16x256xf32>, vector<16x256xf32> -> vector<16x256xf32>
    %39 = arith.addf %30, %38 : vector<16x256xf32>
    %cst_27 = arith.constant 0.000000e+00 : f32
    %40 = vector.broadcast %cst_27 : f32 to vector<16x1xf32>
    %41 = vector.extract_strided_slice %11 {offsets = [0, 0], sizes = [16, 255], strides = [1, 1]} : vector<16x256xf32> to vector<16x255xf32>
    %42 = tpu.concatenate %40, %41 in 1 : vector<16x1xf32>, vector<16x255xf32> -> vector<16x256xf32>
    %43 = vector.broadcast %12 : vector<1x256xf32> to vector<16x256xf32>
    %44 = arith.mulf %42, %43 : vector<16x256xf32>
    %c3 = arith.constant 3 : index
    %c0_28 = arith.constant 0 : index
    %c0_29 = arith.constant 0 : index
    %45 = vector.load %arg5[%c3, %c0_28, %c0_29] : memref<9x16x16xf32, #tpu.memory_space<vmem>>, vector<1x16x16xf32>
    %46 = vector.shape_cast %45 : vector<1x16x16xf32> to vector<16x16xf32>
    %cst_30 = arith.constant dense<0.000000e+00> : vector<16x256xf32>
    %47 = tpu.matmul %46, %44, %cst_30 {dimension_numbers = #tpu.dot_dimension_numbers<[1], [0], [0], [1], [0, 0, 1, 1], [], []>} : vector<16x16xf32>, vector<16x256xf32>, vector<16x256xf32> -> vector<16x256xf32>
    %48 = arith.addf %39, %47 : vector<16x256xf32>
    %c4 = arith.constant 4 : index
    %c0_31 = arith.constant 0 : index
    %c0_32 = arith.constant 0 : index
    %49 = vector.load %arg5[%c4, %c0_31, %c0_32] : memref<9x16x16xf32, #tpu.memory_space<vmem>>, vector<1x16x16xf32>
    %50 = vector.shape_cast %49 : vector<1x16x16xf32> to vector<16x16xf32>
    %cst_33 = arith.constant dense<0.000000e+00> : vector<16x256xf32>
    %51 = tpu.matmul %50, %11, %cst_33 {dimension_numbers = #tpu.dot_dimension_numbers<[1], [0], [0], [1], [0, 0, 1, 1], [], []>} : vector<16x16xf32>, vector<16x256xf32>, vector<16x256xf32> -> vector<16x256xf32>
    %52 = arith.addf %48, %51 : vector<16x256xf32>
    %53 = vector.extract_strided_slice %11 {offsets = [0, 1], sizes = [16, 255], strides = [1, 1]} : vector<16x256xf32> to vector<16x255xf32>
    %cst_34 = arith.constant 0.000000e+00 : f32
    %54 = vector.broadcast %cst_34 : f32 to vector<16x1xf32>
    %55 = tpu.concatenate %53, %54 in 1 : vector<16x255xf32>, vector<16x1xf32> -> vector<16x256xf32>
    %56 = vector.broadcast %13 : vector<1x256xf32> to vector<16x256xf32>
    %57 = arith.mulf %55, %56 : vector<16x256xf32>
    %c5 = arith.constant 5 : index
    %c0_35 = arith.constant 0 : index
    %c0_36 = arith.constant 0 : index
    %58 = vector.load %arg5[%c5, %c0_35, %c0_36] : memref<9x16x16xf32, #tpu.memory_space<vmem>>, vector<1x16x16xf32>
    %59 = vector.shape_cast %58 : vector<1x16x16xf32> to vector<16x16xf32>
    %cst_37 = arith.constant dense<0.000000e+00> : vector<16x256xf32>
    %60 = tpu.matmul %59, %57, %cst_37 {dimension_numbers = #tpu.dot_dimension_numbers<[1], [0], [0], [1], [0, 0, 1, 1], [], []>} : vector<16x16xf32>, vector<16x256xf32>, vector<16x256xf32> -> vector<16x256xf32>
    %61 = arith.addf %52, %60 : vector<16x256xf32>
    %62 = vector.extract_strided_slice %11 {offsets = [0, 15], sizes = [16, 241], strides = [1, 1]} : vector<16x256xf32> to vector<16x241xf32>
    %cst_38 = arith.constant 0.000000e+00 : f32
    %63 = vector.broadcast %cst_38 : f32 to vector<16x15xf32>
    %64 = tpu.concatenate %62, %63 in 1 : vector<16x241xf32>, vector<16x15xf32> -> vector<16x256xf32>
    %65 = vector.broadcast %12 : vector<1x256xf32> to vector<16x256xf32>
    %66 = arith.mulf %64, %65 : vector<16x256xf32>
    %c6 = arith.constant 6 : index
    %c0_39 = arith.constant 0 : index
    %c0_40 = arith.constant 0 : index
    %67 = vector.load %arg5[%c6, %c0_39, %c0_40] : memref<9x16x16xf32, #tpu.memory_space<vmem>>, vector<1x16x16xf32>
    %68 = vector.shape_cast %67 : vector<1x16x16xf32> to vector<16x16xf32>
    %cst_41 = arith.constant dense<0.000000e+00> : vector<16x256xf32>
    %69 = tpu.matmul %68, %66, %cst_41 {dimension_numbers = #tpu.dot_dimension_numbers<[1], [0], [0], [1], [0, 0, 1, 1], [], []>} : vector<16x16xf32>, vector<16x256xf32>, vector<16x256xf32> -> vector<16x256xf32>
    %70 = arith.addf %61, %69 : vector<16x256xf32>
    %71 = vector.extract_strided_slice %11 {offsets = [0, 16], sizes = [16, 240], strides = [1, 1]} : vector<16x256xf32> to vector<16x240xf32>
    %cst_42 = arith.constant 0.000000e+00 : f32
    %72 = vector.broadcast %cst_42 : f32 to vector<16x16xf32>
    %73 = tpu.concatenate %71, %72 in 1 : vector<16x240xf32>, vector<16x16xf32> -> vector<16x256xf32>
    %c7 = arith.constant 7 : index
    %c0_43 = arith.constant 0 : index
    %c0_44 = arith.constant 0 : index
    %74 = vector.load %arg5[%c7, %c0_43, %c0_44] : memref<9x16x16xf32, #tpu.memory_space<vmem>>, vector<1x16x16xf32>
    %75 = vector.shape_cast %74 : vector<1x16x16xf32> to vector<16x16xf32>
    %cst_45 = arith.constant dense<0.000000e+00> : vector<16x256xf32>
    %76 = tpu.matmul %75, %73, %cst_45 {dimension_numbers = #tpu.dot_dimension_numbers<[1], [0], [0], [1], [0, 0, 1, 1], [], []>} : vector<16x16xf32>, vector<16x256xf32>, vector<16x256xf32> -> vector<16x256xf32>
    %77 = arith.addf %70, %76 : vector<16x256xf32>
    %78 = vector.extract_strided_slice %11 {offsets = [0, 17], sizes = [16, 239], strides = [1, 1]} : vector<16x256xf32> to vector<16x239xf32>
    %cst_46 = arith.constant 0.000000e+00 : f32
    %79 = vector.broadcast %cst_46 : f32 to vector<16x17xf32>
    %80 = tpu.concatenate %78, %79 in 1 : vector<16x239xf32>, vector<16x17xf32> -> vector<16x256xf32>
    %81 = vector.broadcast %13 : vector<1x256xf32> to vector<16x256xf32>
    %82 = arith.mulf %80, %81 : vector<16x256xf32>
    %c8 = arith.constant 8 : index
    %c0_47 = arith.constant 0 : index
    %c0_48 = arith.constant 0 : index
    %83 = vector.load %arg5[%c8, %c0_47, %c0_48] : memref<9x16x16xf32, #tpu.memory_space<vmem>>, vector<1x16x16xf32>
    %84 = vector.shape_cast %83 : vector<1x16x16xf32> to vector<16x16xf32>
    %cst_49 = arith.constant dense<0.000000e+00> : vector<16x256xf32>
    %85 = tpu.matmul %84, %82, %cst_49 {dimension_numbers = #tpu.dot_dimension_numbers<[1], [0], [0], [1], [0, 0, 1, 1], [], []>} : vector<16x16xf32>, vector<16x256xf32>, vector<16x256xf32> -> vector<16x256xf32>
    %86 = arith.addf %77, %85 : vector<16x256xf32>
    %c0_50 = arith.constant 0 : index
    %c0_51 = arith.constant 0 : index
    %87 = vector.load %arg6[%c0_50, %c0_51] : memref<16x1xf32, #tpu.memory_space<vmem>>, vector<16x1xf32>
    %88 = vector.broadcast %87 : vector<16x1xf32> to vector<16x256xf32>
    %89 = arith.mulf %86, %88 : vector<16x256xf32>
    %c0_52 = arith.constant 0 : index
    %c0_53 = arith.constant 0 : index
    %90 = vector.load %arg7[%c0_52, %c0_53] : memref<16x1xf32, #tpu.memory_space<vmem>>, vector<16x1xf32>
    %91 = vector.broadcast %90 : vector<16x1xf32> to vector<16x256xf32>
    %92 = arith.addf %89, %91 : vector<16x256xf32>
    %cst_54 = arith.constant 0.000000e+00 : f32
    %93 = vector.broadcast %cst_54 : f32 to vector<16x256xf32>
    %94 = arith.maximumf %92, %93 : vector<16x256xf32>
    %c0_55 = arith.constant 0 : index
    %c0_56 = arith.constant 0 : index
    %95 = vector.load %arg8[%c0_55, %c0_56] : memref<64x16xf32, #tpu.memory_space<vmem>>, vector<64x16xf32>
    %cst_57 = arith.constant dense<0.000000e+00> : vector<64x256xf32>
    %96 = tpu.matmul %95, %94, %cst_57 {dimension_numbers = #tpu.dot_dimension_numbers<[1], [0], [0], [1], [0, 0, 1, 1], [], []>} : vector<64x16xf32>, vector<16x256xf32>, vector<64x256xf32> -> vector<64x256xf32>
    %c0_58 = arith.constant 0 : index
    %c0_59 = arith.constant 0 : index
    %97 = vector.load %arg9[%c0_58, %c0_59] : memref<64x1xf32, #tpu.memory_space<vmem>>, vector<64x1xf32>
    %98 = vector.broadcast %97 : vector<64x1xf32> to vector<64x256xf32>
    %99 = arith.mulf %96, %98 : vector<64x256xf32>
    %c0_60 = arith.constant 0 : index
    %c0_61 = arith.constant 0 : index
    %100 = vector.load %arg10[%c0_60, %c0_61] : memref<64x1xf32, #tpu.memory_space<vmem>>, vector<64x1xf32>
    %101 = vector.broadcast %100 : vector<64x1xf32> to vector<64x256xf32>
    %102 = arith.addf %99, %101 : vector<64x256xf32>
    %cst_62 = arith.constant dense<0.000000e+00> : vector<64xf32>
    %103 = vector.multi_reduction <add>, %102, %cst_62 [1] : vector<64x256xf32> to vector<64xf32>
    %104 = vector.shape_cast %103 : vector<64xf32> to vector<64x1xf32>
    %cst_63 = arith.constant 3.906250e-03 : f32
    %105 = vector.broadcast %cst_63 : f32 to vector<64x1xf32>
    %106 = arith.mulf %104, %105 : vector<64x1xf32>
    %c0_64 = arith.constant 0 : index
    %c0_65 = arith.constant 0 : index
    %107 = vector.load %arg11[%c0_64, %c0_65] : memref<16x64xf32, #tpu.memory_space<vmem>>, vector<16x64xf32>
    %cst_66 = arith.constant dense<0.000000e+00> : vector<16x1xf32>
    %108 = tpu.matmul %107, %106, %cst_66 {dimension_numbers = #tpu.dot_dimension_numbers<[1], [0], [0], [1], [0, 0, 1, 1], [], []>} : vector<16x64xf32>, vector<64x1xf32>, vector<16x1xf32> -> vector<16x1xf32>
    %cst_67 = arith.constant 0.000000e+00 : f32
    %109 = vector.broadcast %cst_67 : f32 to vector<16x1xf32>
    %110 = arith.maximumf %108, %109 : vector<16x1xf32>
    %c0_68 = arith.constant 0 : index
    %c0_69 = arith.constant 0 : index
    %111 = vector.load %arg12[%c0_68, %c0_69] : memref<64x16xf32, #tpu.memory_space<vmem>>, vector<64x16xf32>
    %cst_70 = arith.constant dense<0.000000e+00> : vector<64x1xf32>
    %112 = tpu.matmul %111, %110, %cst_70 {dimension_numbers = #tpu.dot_dimension_numbers<[1], [0], [0], [1], [0, 0, 1, 1], [], []>} : vector<64x16xf32>, vector<16x1xf32>, vector<64x1xf32> -> vector<64x1xf32>
    %113 = arith.negf %112 : vector<64x1xf32>
    %114 = math.exp %113 : vector<64x1xf32>
    %cst_71 = arith.constant 1.000000e+00 : f32
    %115 = vector.broadcast %cst_71 : f32 to vector<64x1xf32>
    %116 = arith.addf %115, %114 : vector<64x1xf32>
    %117 = arith.divf %115, %116 : vector<64x1xf32>
    %118 = vector.broadcast %117 : vector<64x1xf32> to vector<64x256xf32>
    %119 = arith.mulf %102, %118 : vector<64x256xf32>
    %cst_72 = arith.constant 0.000000e+00 : f32
    %120 = vector.broadcast %cst_72 : f32 to vector<64x256xf32>
    %121 = arith.maximumf %119, %120 : vector<64x256xf32>
    %c0_73 = arith.constant 0 : index
    %c0_74 = arith.constant 0 : index
    %c0_75 = arith.constant 0 : index
    %122 = vector.load %arg15[%c0_73, %c0_74, %c0_75] : memref<1x64x256xf32, #tpu.memory_space<vmem>>, vector<1x64x256xf32>
    %123 = vector.shape_cast %122 : vector<1x64x256xf32> to vector<64x256xf32>
    %124 = vector.shape_cast %121 : vector<64x256xf32> to vector<1x64x256xf32>
    tpu.vector_store %arg15[%c0_73, %c0_74, %c0_75], %124 {strides = array<i32>} : memref<1x64x256xf32, #tpu.memory_space<vmem>>, vector<1x64x256xf32>,
    return
  }
  func.func @transform_0(%arg0: i32) -> (i32, i32, i32) {
    %c0_i32 = arith.constant 0 : i32
    %c0_i32_0 = arith.constant 0 : i32
    %c0_i32_1 = arith.constant 0 : i32
    return %arg0, %c0_i32, %c0_i32_0 : i32, i32, i32
  }
  func.func @transform_1(%arg0: i32) -> (i32, i32) {
    %c0_i32 = arith.constant 0 : i32
    %c0_i32_0 = arith.constant 0 : i32
    %c0_i32_1 = arith.constant 0 : i32
    return %c0_i32, %c0_i32_0 : i32, i32
  }
  func.func @transform_2(%arg0: i32) -> (i32, i32) {
    %c0_i32 = arith.constant 0 : i32
    %c0_i32_0 = arith.constant 0 : i32
    %c0_i32_1 = arith.constant 0 : i32
    return %c0_i32, %c0_i32_0 : i32, i32
  }
  func.func @transform_3(%arg0: i32) -> (i32, i32) {
    %c0_i32 = arith.constant 0 : i32
    %c0_i32_0 = arith.constant 0 : i32
    %c0_i32_1 = arith.constant 0 : i32
    return %c0_i32, %c0_i32_0 : i32, i32
  }
  func.func @transform_4(%arg0: i32) -> (i32, i32, i32) {
    %c0_i32 = arith.constant 0 : i32
    %c0_i32_0 = arith.constant 0 : i32
    %c0_i32_1 = arith.constant 0 : i32
    %c0_i32_2 = arith.constant 0 : i32
    return %c0_i32, %c0_i32_0, %c0_i32_1 : i32, i32, i32
  }
  func.func @transform_5(%arg0: i32) -> (i32, i32) {
    %c0_i32 = arith.constant 0 : i32
    %c0_i32_0 = arith.constant 0 : i32
    %c0_i32_1 = arith.constant 0 : i32
    return %c0_i32, %c0_i32_0 : i32, i32
  }
  func.func @transform_6(%arg0: i32) -> (i32, i32) {
    %c0_i32 = arith.constant 0 : i32
    %c0_i32_0 = arith.constant 0 : i32
    %c0_i32_1 = arith.constant 0 : i32
    return %c0_i32, %c0_i32_0 : i32, i32
  }
  func.func @transform_7(%arg0: i32) -> (i32, i32) {
    %c0_i32 = arith.constant 0 : i32
    %c0_i32_0 = arith.constant 0 : i32
    %c0_i32_1 = arith.constant 0 : i32
    return %c0_i32, %c0_i32_0 : i32, i32
  }
  func.func @transform_8(%arg0: i32) -> (i32, i32) {
    %c0_i32 = arith.constant 0 : i32
    %c0_i32_0 = arith.constant 0 : i32
    %c0_i32_1 = arith.constant 0 : i32
    return %c0_i32, %c0_i32_0 : i32, i32
  }
  func.func @transform_9(%arg0: i32) -> (i32, i32) {
    %c0_i32 = arith.constant 0 : i32
    %c0_i32_0 = arith.constant 0 : i32
    %c0_i32_1 = arith.constant 0 : i32
    return %c0_i32, %c0_i32_0 : i32, i32
  }
  func.func @transform_10(%arg0: i32) -> (i32, i32) {
    %c0_i32 = arith.constant 0 : i32
    %c0_i32_0 = arith.constant 0 : i32
    %c0_i32_1 = arith.constant 0 : i32
    return %c0_i32, %c0_i32_0 : i32, i32
  }
  func.func @transform_11(%arg0: i32) -> (i32, i32) {
    %c0_i32 = arith.constant 0 : i32
    %c0_i32_0 = arith.constant 0 : i32
    %c0_i32_1 = arith.constant 0 : i32
    return %c0_i32, %c0_i32_0 : i32, i32
  }
  func.func @transform_12(%arg0: i32) -> (i32, i32) {
    %c0_i32 = arith.constant 0 : i32
    %c0_i32_0 = arith.constant 0 : i32
    %c0_i32_1 = arith.constant 0 : i32
    return %c0_i32, %c0_i32_0 : i32, i32
  }
  func.func @transform_13(%arg0: i32) -> (i32, i32) {
    %c0_i32 = arith.constant 0 : i32
    %c0_i32_0 = arith.constant 0 : i32
    %c0_i32_1 = arith.constant 0 : i32
    return %c0_i32, %c0_i32_0 : i32, i32
  }
  func.func @transform_14(%arg0: i32) -> (i32, i32, i32) {
    %c0_i32 = arith.constant 0 : i32
    %c0_i32_0 = arith.constant 0 : i32
    %c0_i32_1 = arith.constant 0 : i32
    return %arg0, %c0_i32, %c0_i32_0 : i32, i32, i32
  }
}

</mosaic_0001>

<llo_original>
// kernel: tpu_custom_call.1
$region0: #{tpu_custom_call.1}
  #allocation0 [shape = 'u32[]', space=smem, size = 0x4, offset = 0x4, fixed_abs, tag = 'smem constant byte address 0x4 - core index']
  #allocation1 [shape = 'u32[144,128]{1,0:T(1,128)}', space=vmem, size = 0x12000, scoped, tag = 'internal scratch']
  %s0 = inlined_call_operand.vmem [shape: f32[2,32,256], index: 0, kind: input, shape index: {}]
  %s1 = inlined_call_operand.vmem [shape: f32[16,32], index: 1, kind: input, shape index: {}]
  %s2 = inlined_call_operand.vmem [shape: f32[16,1], index: 2, kind: input, shape index: {}]
  %s3 = inlined_call_operand.vmem [shape: f32[16,1], index: 3, kind: input, shape index: {}]
  %s4 = inlined_call_operand.vmem [shape: f32[9,16,16], index: 4, kind: input, shape index: {}]
  %s5 = inlined_call_operand.vmem [shape: f32[16,1], index: 5, kind: input, shape index: {}]
  %s6 = inlined_call_operand.vmem [shape: f32[16,1], index: 6, kind: input, shape index: {}]
  %s7 = inlined_call_operand.vmem [shape: f32[64,16], index: 7, kind: input, shape index: {}]
  %s8 = inlined_call_operand.vmem [shape: f32[64,1], index: 8, kind: input, shape index: {}]
  %s9 = inlined_call_operand.vmem [shape: f32[64,1], index: 9, kind: input, shape index: {}]
  %s10 = inlined_call_operand.vmem [shape: f32[16,64], index: 10, kind: input, shape index: {}]
  %s11 = inlined_call_operand.vmem [shape: f32[64,16], index: 11, kind: input, shape index: {}]
  %s12 = inlined_call_operand.vmem [shape: f32[1,256], index: 12, kind: input, shape index: {}]
  %s13 = inlined_call_operand.vmem [shape: f32[1,256], index: 13, kind: input, shape index: {}]
  %s14 = inlined_call_operand.hbm [shape: f32[2,64,256], index: 14, kind: output, shape index: {}]
  %s15 = sld [smem:[#allocation0]]
  $region89: #{tpu_custom_call.1} parent=0
    _
  %s17 = ssub.s32 1, %s15
  %s18 = scalar_select 0, %s17, %s15
  $region1: #{tpu_custom_call.1} parent=0
    #allocation2 [shape = 'u8[131072]{0}', space=vmem, size = 0x20000, scoped, tag = 'output window, operand 0']
    #allocation3 [shape = 's32[2]{0}', space=sflag, size = 0x8, scoped, tag = 'scoped memory for tpu_custom_call.1']
    %19 = vsyncpa [#allocation3], 0
    %s20 = scalar_lea.sflag [#allocation3], 1
    %21 = vsyncpa %s20, 0
    loop: start=0, step=1, limit=4
    $region2: #{tpu_custom_call.1} parent=1 // loop_pre_header
      _
    $region3: #{tpu_custom_call.1} parent=1 // loop_header
      %s23 = sphi 0, %s27
      %p24 = scmp.ge.s32.totalorder %s23, 4
      %s33 = sphi 0, %s35
      %s36 = sphi 0, %s33
      %s37 = sphi 0, %s36
      %s53 = sphi 0, %s37
      %s57 = sphi 0, %s57
      %s59 = sphi 0, %s57
      %s60 = sphi 0, %s59
      %s74 = sphi 0, %s60
      %s78 = sphi 0, %s78
      %s80 = sphi 0, %s78
      %s81 = sphi 0, %s80
      %s95 = sphi 0, %s81
      %s99 = sphi 0, %s99
      %s101 = sphi 0, %s99
      %s102 = sphi 0, %s101
      %s116 = sphi 0, %s102
      %s120 = sphi 0, %s120
      %s122 = sphi 0, %s120
      %s123 = sphi 0, %s122
      %s137 = sphi 0, %s123
      %s141 = sphi 0, %s141
      %s143 = sphi 0, %s141
      %s144 = sphi 0, %s143
      %s158 = sphi 0, %s144
      %s162 = sphi 0, %s162
      %s164 = sphi 0, %s162
      %s165 = sphi 0, %s164
      %s179 = sphi 0, %s165
      %s183 = sphi 0, %s183
      %s185 = sphi 0, %s183
      %s186 = sphi 0, %s185
      %s200 = sphi 0, %s186
      %s204 = sphi 0, %s204
      %s206 = sphi 0, %s204
      %s207 = sphi 0, %s206
      %s221 = sphi 0, %s207
      %s225 = sphi 0, %s225
      %s227 = sphi 0, %s225
      %s228 = sphi 0, %s227
      %s242 = sphi 0, %s228
      %s246 = sphi 0, %s246
      %s248 = sphi 0, %s246
      %s249 = sphi 0, %s248
      %s263 = sphi 0, %s249
      %s267 = sphi 0, %s267
      %s269 = sphi 0, %s267
      %s270 = sphi 0, %s269
      %s284 = sphi 0, %s270
      %s288 = sphi 0, %s288
      %s290 = sphi 0, %s288
      %s291 = sphi 0, %s290
      %s305 = sphi 0, %s291
      %s309 = sphi 0, %s309
      %s311 = sphi 0, %s309
      %s312 = sphi 0, %s311
      %s326 = sphi 0, %s312
      %s332 = sphi 0, %s334
      %s335 = sphi 0, %s332
      %s336 = sphi 0, %s335
      %s352 = sphi 0, %s336
    $region4: #{tpu_custom_call.1} parent=1 // loop_header_branch
      %26 = sbr.rel (%p24) target = $region8
    $region5: #{tpu_custom_call.1} parent=1 // loop_body
      %s28 = ssub.s32 %s23, 1
      %s29 = ssub.s32 %s23, 2
      %s30 = sadd.s32 %s23, 1
      %s31 = ssub.s32 %s23, %s30
      %p32 = scmp.eq.s32.totalorder %s31, 0
      %s34 = sadd.s32 %s33, 1
      %s35 = scalar_select %p32, %s33, %s34
      %p38 = pneg %p32
      %p39 = scmp.eq.s32.totalorder %s23, 1
      %p40 = por %p38, %p39
      %p41 = scmp.ne.s32.totalorder %s33, %s36
      %p42 = scmp.eq.s32.totalorder %s23, 0
      %p43 = por %p41, %p42
      %p44 = scmp.ne.s32.totalorder %s33, %s36
      %p45 = scmp.eq.s32.totalorder %s28, 1
      %p46 = por %p44, %p45
      %p47 = scmp.ne.s32.totalorder %s36, %s37
      %p48 = scmp.eq.s32.totalorder %s28, 0
      %p49 = por %p47, %p48
      %p50 = scmp.ne.s32.totalorder %s36, %s37
      %p51 = scmp.eq.s32.totalorder %s29, 1
      %p52 = por %p50, %p51
      %p54 = scmp.ne.s32.totalorder %s37, %s53
      %p55 = scmp.eq.s32.totalorder %s29, 0
      %p56 = por %p54, %p55
      %s58 = sadd.s32 %s57, 1
      %p61 = scmp.eq.s32.totalorder %s23, 1
      %p62 = scmp.ne.s32.totalorder %s57, %s59
      %p63 = scmp.eq.s32.totalorder %s23, 0
      %p64 = por %p62, %p63
      %p65 = scmp.ne.s32.totalorder %s57, %s59
      %p66 = scmp.eq.s32.totalorder %s28, 1
      %p67 = por %p65, %p66
      %p68 = scmp.ne.s32.totalorder %s59, %s60
      %p69 = scmp.eq.s32.totalorder %s28, 0
      %p70 = por %p68, %p69
      %p71 = scmp.ne.s32.totalorder %s59, %s60
      %p72 = scmp.eq.s32.totalorder %s29, 1
      %p73 = por %p71, %p72
      %p75 = scmp.ne.s32.totalorder %s60, %s74
      %p76 = scmp.eq.s32.totalorder %s29, 0
      %p77 = por %p75, %p76
      %s79 = sadd.s32 %s78, 1
      %p82 = scmp.eq.s32.totalorder %s23, 1
      %p83 = scmp.ne.s32.totalorder %s78, %s80
      %p84 = scmp.eq.s32.totalorder %s23, 0
      %p85 = por %p83, %p84
      %p86 = scmp.ne.s32.totalorder %s78, %s80
      %p87 = scmp.eq.s32.totalorder %s28, 1
      %p88 = por %p86, %p87
      %p89 = scmp.ne.s32.totalorder %s80, %s81
      %p90 = scmp.eq.s32.totalorder %s28, 0
      %p91 = por %p89, %p90
      %p92 = scmp.ne.s32.totalorder %s80, %s81
      %p93 = scmp.eq.s32.totalorder %s29, 1
      %p94 = por %p92, %p93
      %p96 = scmp.ne.s32.totalorder %s81, %s95
      %p97 = scmp.eq.s32.totalorder %s29, 0
      %p98 = por %p96, %p97
      %s100 = sadd.s32 %s99, 1
      %p103 = scmp.eq.s32.totalorder %s23, 1
      %p104 = scmp.ne.s32.totalorder %s99, %s101
      %p105 = scmp.eq.s32.totalorder %s23, 0
      %p106 = por %p104, %p105
      %p107 = scmp.ne.s32.totalorder %s99, %s101
      %p108 = scmp.eq.s32.totalorder %s28, 1
      %p109 = por %p107, %p108
      %p110 = scmp.ne.s32.totalorder %s101, %s102
      %p111 = scmp.eq.s32.totalorder %s28, 0
      %p112 = por %p110, %p111
      %p113 = scmp.ne.s32.totalorder %s101, %s102
      %p114 = scmp.eq.s32.totalorder %s29, 1
      %p115 = por %p113, %p114
      %p117 = scmp.ne.s32.totalorder %s102, %s116
      %p118 = scmp.eq.s32.totalorder %s29, 0
      %p119 = por %p117, %p118
      %s121 = sadd.s32 %s120, 1
      %p124 = scmp.eq.s32.totalorder %s23, 1
      %p125 = scmp.ne.s32.totalorder %s120, %s122
      %p126 = scmp.eq.s32.totalorder %s23, 0
      %p127 = por %p125, %p126
      %p128 = scmp.ne.s32.totalorder %s120, %s122
      %p129 = scmp.eq.s32.totalorder %s28, 1
      %p130 = por %p128, %p129
      %p131 = scmp.ne.s32.totalorder %s122, %s123
      %p132 = scmp.eq.s32.totalorder %s28, 0
      %p133 = por %p131, %p132
      %p134 = scmp.ne.s32.totalorder %s122, %s123
      %p135 = scmp.eq.s32.totalorder %s29, 1
      %p136 = por %p134, %p135
      %p138 = scmp.ne.s32.totalorder %s123, %s137
      %p139 = scmp.eq.s32.totalorder %s29, 0
      %p140 = por %p138, %p139
      %s142 = sadd.s32 %s141, 1
      %p145 = scmp.eq.s32.totalorder %s23, 1
      %p146 = scmp.ne.s32.totalorder %s141, %s143
      %p147 = scmp.eq.s32.totalorder %s23, 0
      %p148 = por %p146, %p147
      %p149 = scmp.ne.s32.totalorder %s141, %s143
      %p150 = scmp.eq.s32.totalorder %s28, 1
      %p151 = por %p149, %p150
      %p152 = scmp.ne.s32.totalorder %s143, %s144
      %p153 = scmp.eq.s32.totalorder %s28, 0
      %p154 = por %p152, %p153
      %p155 = scmp.ne.s32.totalorder %s143, %s144
      %p156 = scmp.eq.s32.totalorder %s29, 1
      %p157 = por %p155, %p156
      %p159 = scmp.ne.s32.totalorder %s144, %s158
      %p160 = scmp.eq.s32.totalorder %s29, 0
      %p161 = por %p159, %p160
      %s163 = sadd.s32 %s162, 1
      %p166 = scmp.eq.s32.totalorder %s23, 1
      %p167 = scmp.ne.s32.totalorder %s162, %s164
      %p168 = scmp.eq.s32.totalorder %s23, 0
      %p169 = por %p167, %p168
      %p170 = scmp.ne.s32.totalorder %s162, %s164
      %p171 = scmp.eq.s32.totalorder %s28, 1
      %p172 = por %p170, %p171
      %p173 = scmp.ne.s32.totalorder %s164, %s165
      %p174 = scmp.eq.s32.totalorder %s28, 0
      %p175 = por %p173, %p174
      %p176 = scmp.ne.s32.totalorder %s164, %s165
      %p177 = scmp.eq.s32.totalorder %s29, 1
      %p178 = por %p176, %p177
      %p180 = scmp.ne.s32.totalorder %s165, %s179
      %p181 = scmp.eq.s32.totalorder %s29, 0
      %p182 = por %p180, %p181
      %s184 = sadd.s32 %s183, 1
      %p187 = scmp.eq.s32.totalorder %s23, 1
      %p188 = scmp.ne.s32.totalorder %s183, %s185
      %p189 = scmp.eq.s32.totalorder %s23, 0
      %p190 = por %p188, %p189
      %p191 = scmp.ne.s32.totalorder %s183, %s185
      %p192 = scmp.eq.s32.totalorder %s28, 1
      %p193 = por %p191, %p192
      %p194 = scmp.ne.s32.totalorder %s185, %s186
      %p195 = scmp.eq.s32.totalorder %s28, 0
      %p196 = por %p194, %p195
      %p197 = scmp.ne.s32.totalorder %s185, %s186
      %p198 = scmp.eq.s32.totalorder %s29, 1
      %p199 = por %p197, %p198
      %p201 = scmp.ne.s32.totalorder %s186, %s200
      %p202 = scmp.eq.s32.totalorder %s29, 0
      %p203 = por %p201, %p202
      %s205 = sadd.s32 %s204, 1
      %p208 = scmp.eq.s32.totalorder %s23, 1
      %p209 = scmp.ne.s32.totalorder %s204, %s206
      %p210 = scmp.eq.s32.totalorder %s23, 0
      %p211 = por %p209, %p210
      %p212 = scmp.ne.s32.totalorder %s204, %s206
      %p213 = scmp.eq.s32.totalorder %s28, 1
      %p214 = por %p212, %p213
      %p215 = scmp.ne.s32.totalorder %s206, %s207
      %p216 = scmp.eq.s32.totalorder %s28, 0
      %p217 = por %p215, %p216
      %p218 = scmp.ne.s32.totalorder %s206, %s207
      %p219 = scmp.eq.s32.totalorder %s29, 1
      %p220 = por %p218, %p219
      %p222 = scmp.ne.s32.totalorder %s207, %s221
      %p223 = scmp.eq.s32.totalorder %s29, 0
      %p224 = por %p222, %p223
      %s226 = sadd.s32 %s225, 1
      %p229 = scmp.eq.s32.totalorder %s23, 1
      %p230 = scmp.ne.s32.totalorder %s225, %s227
      %p231 = scmp.eq.s32.totalorder %s23, 0
      %p232 = por %p230, %p231
      %p233 = scmp.ne.s32.totalorder %s225, %s227
      %p234 = scmp.eq.s32.totalorder %s28, 1
      %p235 = por %p233, %p234
      %p236 = scmp.ne.s32.totalorder %s227, %s228
      %p237 = scmp.eq.s32.totalorder %s28, 0
      %p238 = por %p236, %p237
      %p239 = scmp.ne.s32.totalorder %s227, %s228
      %p240 = scmp.eq.s32.totalorder %s29, 1
      %p241 = por %p239, %p240
      %p243 = scmp.ne.s32.totalorder %s228, %s242
      %p244 = scmp.eq.s32.totalorder %s29, 0
      %p245 = por %p243, %p244
      %s247 = sadd.s32 %s246, 1
      %p250 = scmp.eq.s32.totalorder %s23, 1
      %p251 = scmp.ne.s32.totalorder %s246, %s248
      %p252 = scmp.eq.s32.totalorder %s23, 0
      %p253 = por %p251, %p252
      %p254 = scmp.ne.s32.totalorder %s246, %s248
      %p255 = scmp.eq.s32.totalorder %s28, 1
      %p256 = por %p254, %p255
      %p257 = scmp.ne.s32.totalorder %s248, %s249
      %p258 = scmp.eq.s32.totalorder %s28, 0
      %p259 = por %p257, %p258
      %p260 = scmp.ne.s32.totalorder %s248, %s249
      %p261 = scmp.eq.s32.totalorder %s29, 1
      %p262 = por %p260, %p261
      %p264 = scmp.ne.s32.totalorder %s249, %s263
      %p265 = scmp.eq.s32.totalorder %s29, 0
      %p266 = por %p264, %p265
      %s268 = sadd.s32 %s267, 1
      %p271 = scmp.eq.s32.totalorder %s23, 1
      %p272 = scmp.ne.s32.totalorder %s267, %s269
      %p273 = scmp.eq.s32.totalorder %s23, 0
      %p274 = por %p272, %p273
      %p275 = scmp.ne.s32.totalorder %s267, %s269
      %p276 = scmp.eq.s32.totalorder %s28, 1
      %p277 = por %p275, %p276
      %p278 = scmp.ne.s32.totalorder %s269, %s270
      %p279 = scmp.eq.s32.totalorder %s28, 0
      %p280 = por %p278, %p279
      %p281 = scmp.ne.s32.totalorder %s269, %s270
      %p282 = scmp.eq.s32.totalorder %s29, 1
      %p283 = por %p281, %p282
      %p285 = scmp.ne.s32.totalorder %s270, %s284
      %p286 = scmp.eq.s32.totalorder %s29, 0
      %p287 = por %p285, %p286
      %s289 = sadd.s32 %s288, 1
      %p292 = scmp.eq.s32.totalorder %s23, 1
      %p293 = scmp.ne.s32.totalorder %s288, %s290
      %p294 = scmp.eq.s32.totalorder %s23, 0
      %p295 = por %p293, %p294
      %p296 = scmp.ne.s32.totalorder %s288, %s290
      %p297 = scmp.eq.s32.totalorder %s28, 1
      %p298 = por %p296, %p297
      %p299 = scmp.ne.s32.totalorder %s290, %s291
      %p300 = scmp.eq.s32.totalorder %s28, 0
      %p301 = por %p299, %p300
      %p302 = scmp.ne.s32.totalorder %s290, %s291
      %p303 = scmp.eq.s32.totalorder %s29, 1
      %p304 = por %p302, %p303
      %p306 = scmp.ne.s32.totalorder %s291, %s305
      %p307 = scmp.eq.s32.totalorder %s29, 0
      %p308 = por %p306, %p307
      %s310 = sadd.s32 %s309, 1
      %p313 = scmp.eq.s32.totalorder %s23, 1
      %p314 = scmp.ne.s32.totalorder %s309, %s311
      %p315 = scmp.eq.s32.totalorder %s23, 0
      %p316 = por %p314, %p315
      %p317 = scmp.ne.s32.totalorder %s309, %s311
      %p318 = scmp.eq.s32.totalorder %s28, 1
      %p319 = por %p317, %p318
      %p320 = scmp.ne.s32.totalorder %s311, %s312
      %p321 = scmp.eq.s32.totalorder %s28, 0
      %p322 = por %p320, %p321
      %p323 = scmp.ne.s32.totalorder %s311, %s312
      %p324 = scmp.eq.s32.totalorder %s29, 1
      %p325 = por %p323, %p324
      %p327 = scmp.ne.s32.totalorder %s312, %s326
      %p328 = scmp.eq.s32.totalorder %s29, 0
      %p329 = por %p327, %p328
      %s330 = ssub.s32 %s23, %s30
      %p331 = scmp.eq.s32.totalorder %s330, 0
      %s333 = sadd.s32 %s332, 1
      %s334 = scalar_select %p331, %s332, %s333
      %p337 = pneg %p331
      %p338 = scmp.eq.s32.totalorder %s23, 1
      %p339 = por %p337, %p338
      %p340 = scmp.ne.s32.totalorder %s332, %s335
      %p341 = scmp.eq.s32.totalorder %s23, 0
      %p342 = por %p340, %p341
      %p343 = scmp.ne.s32.totalorder %s332, %s335
      %p344 = scmp.eq.s32.totalorder %s28, 1
      %p345 = por %p343, %p344
      %p346 = scmp.ne.s32.totalorder %s335, %s336
      %p347 = scmp.eq.s32.totalorder %s28, 0
      %p348 = por %p346, %p347
      %p349 = scmp.ne.s32.totalorder %s335, %s336
      %p350 = scmp.eq.s32.totalorder %s29, 1
      %p351 = por %p349, %p350
      %p353 = scmp.ne.s32.totalorder %s336, %s352
      %p354 = scmp.eq.s32.totalorder %s29, 0
      %p355 = por %p353, %p354
      %p356 = scmp.le.s32.totalorder 1, %s23
      %p357 = scmp.lt.s32.totalorder %s23, 3
      %p358 = pnand %p356, %p357
      %p359 = pneg %p358
      // Predicated region
      $region9: #{tpu_custom_call.1} parent=5 // pred_check
        _
      $region10: #{tpu_custom_call.1} parent=5 // pred_check_branch
        %361 = sbr.rel (%p358) target = $region12
      $region11: #{tpu_custom_call.1} parent=5 // pred_region
        %s362 = ssub.s32 %s23, 1
        // Predicated region
        $region13: #{tpu_custom_call.1} parent=11 // pred_check
          %p363 = pneg %p70
        $region14: #{tpu_custom_call.1} parent=11 // pred_check_branch
          %365 = sbr.rel (%p363) target = $region16
        $region15: #{tpu_custom_call.1} parent=11 // pred_region
          _
        $region16: #{tpu_custom_call.1} parent=11 // pred_fallthru
          _
        // Predicated region
        $region17: #{tpu_custom_call.1} parent=11 // pred_check
          %p366 = pneg %p91
        $region18: #{tpu_custom_call.1} parent=11 // pred_check_branch
          %368 = sbr.rel (%p366) target = $region20
        $region19: #{tpu_custom_call.1} parent=11 // pred_region
          _
        $region20: #{tpu_custom_call.1} parent=11 // pred_fallthru
          _
        // Predicated region
        $region21: #{tpu_custom_call.1} parent=11 // pred_check
          %p369 = pneg %p112
        $region22: #{tpu_custom_call.1} parent=11 // pred_check_branch
          %371 = sbr.rel (%p369) target = $region24
        $region23: #{tpu_custom_call.1} parent=11 // pred_region
          _
        $region24: #{tpu_custom_call.1} parent=11 // pred_fallthru
          _
        // Predicated region
        $region25: #{tpu_custom_call.1} parent=11 // pred_check
          %p372 = pneg %p133
        $region26: #{tpu_custom_call.1} parent=11 // pred_check_branch
          %374 = sbr.rel (%p372) target = $region28
        $region27: #{tpu_custom_call.1} parent=11 // pred_region
          _
        $region28: #{tpu_custom_call.1} parent=11 // pred_fallthru
          _
        // Predicated region
        $region29: #{tpu_custom_call.1} parent=11 // pred_check
          %p375 = pneg %p154
        $region30: #{tpu_custom_call.1} parent=11 // pred_check_branch
          %377 = sbr.rel (%p375) target = $region32
        $region31: #{tpu_custom_call.1} parent=11 // pred_region
          _
        $region32: #{tpu_custom_call.1} parent=11 // pred_fallthru
          _
        // Predicated region
        $region33: #{tpu_custom_call.1} parent=11 // pred_check
          %p378 = pneg %p175
        $region34: #{tpu_custom_call.1} parent=11 // pred_check_branch
          %380 = sbr.rel (%p378) target = $region36
        $region35: #{tpu_custom_call.1} parent=11 // pred_region
          _
        $region36: #{tpu_custom_call.1} parent=11 // pred_fallthru
          _
        // Predicated region
        $region37: #{tpu_custom_call.1} parent=11 // pred_check
          %p381 = pneg %p196
        $region38: #{tpu_custom_call.1} parent=11 // pred_check_branch
          %383 = sbr.rel (%p381) target = $region40
        $region39: #{tpu_custom_call.1} parent=11 // pred_region
          _
        $region40: #{tpu_custom_call.1} parent=11 // pred_fallthru
          _
        // Predicated region
        $region41: #{tpu_custom_call.1} parent=11 // pred_check
          %p384 = pneg %p217
        $region42: #{tpu_custom_call.1} parent=11 // pred_check_branch
          %386 = sbr.rel (%p384) target = $region44
        $region43: #{tpu_custom_call.1} parent=11 // pred_region
          _
        $region44: #{tpu_custom_call.1} parent=11 // pred_fallthru
          _
        // Predicated region
        $region45: #{tpu_custom_call.1} parent=11 // pred_check
          %p387 = pneg %p238
        $region46: #{tpu_custom_call.1} parent=11 // pred_check_branch
          %389 = sbr.rel (%p387) target = $region48
        $region47: #{tpu_custom_call.1} parent=11 // pred_region
          _
        $region48: #{tpu_custom_call.1} parent=11 // pred_fallthru
          _
        // Predicated region
        $region49: #{tpu_custom_call.1} parent=11 // pred_check
          %p390 = pneg %p259
        $region50: #{tpu_custom_call.1} parent=11 // pred_check_branch
          %392 = sbr.rel (%p390) target = $region52
        $region51: #{tpu_custom_call.1} parent=11 // pred_region
          _
        $region52: #{tpu_custom_call.1} parent=11 // pred_fallthru
          _
        // Predicated region
        $region53: #{tpu_custom_call.1} parent=11 // pred_check
          %p393 = pneg %p280
        $region54: #{tpu_custom_call.1} parent=11 // pred_check_branch
          %395 = sbr.rel (%p393) target = $region56
        $region55: #{tpu_custom_call.1} parent=11 // pred_region
          _
        $region56: #{tpu_custom_call.1} parent=11 // pred_fallthru
          _
        // Predicated region
        $region57: #{tpu_custom_call.1} parent=11 // pred_check
          %p396 = pneg %p301
        $region58: #{tpu_custom_call.1} parent=11 // pred_check_branch
          %398 = sbr.rel (%p396) target = $region60
        $region59: #{tpu_custom_call.1} parent=11 // pred_region
          _
        $region60: #{tpu_custom_call.1} parent=11 // pred_fallthru
          _
        // Predicated region
        $region61: #{tpu_custom_call.1} parent=11 // pred_check
          %p399 = pneg %p322
        $region62: #{tpu_custom_call.1} parent=11 // pred_check_branch
          %401 = sbr.rel (%p399) target = $region64
        $region63: #{tpu_custom_call.1} parent=11 // pred_region
          _
        $region64: #{tpu_custom_call.1} parent=11 // pred_fallthru
          _
      $region12: #{tpu_custom_call.1} parent=5 // pred_fallthru
        _
      %p402 = scmp.lt.s32.totalorder %s23, 2
      // Predicated region
      $region65: #{tpu_custom_call.1} parent=5 // pred_check
        %p403 = pneg %p402
      $region66: #{tpu_custom_call.1} parent=5 // pred_check_branch
        %405 = sbr.rel (%p403) target = $region68
      $region67: #{tpu_custom_call.1} parent=5 // pred_region
        // Predicated region
        $region69: #{tpu_custom_call.1} parent=67 // pred_check
          %p406 = pneg %p43
        $region70: #{tpu_custom_call.1} parent=67 // pred_check_branch
          %408 = sbr.rel (%p406) target = $region72
        $region71: #{tpu_custom_call.1} parent=67 // pred_region
          %p409 = scmp.lt.s32.totalorder %s23, 1
          %s410 = scalar_select %p409, %s23, 1
          %s411 = smul.addr %s410, 8
          %s412 = smul.addr %s411, 8
          %s413 = scalar_lea.vmem %s0, %s412
        $region72: #{tpu_custom_call.1} parent=67 // pred_fallthru
          _
      $region68: #{tpu_custom_call.1} parent=5 // pred_fallthru
        _
      %p414 = scmp.le.s32.totalorder 1, %s23
      %p415 = scmp.lt.s32.totalorder %s23, 3
      %p416 = pnand %p414, %p415
      %p417 = pneg %p416
      // Predicated region
      $region73: #{tpu_custom_call.1} parent=5 // pred_check
        _
      $region74: #{tpu_custom_call.1} parent=5 // pred_check_branch
        %419 = sbr.rel (%p416) target = $region76
      $region75: #{tpu_custom_call.1} parent=5 // pred_region
        %s420 = ssub.s32 %s23, 1
        %p421 = scmp.lt.s32.totalorder %s28, 1
        %s422 = scalar_select %p421, %s28, 1
        %s423 = smul.addr %s422, 8
        %s424 = smul.addr %s423, 8
        %s425 = scalar_lea.vmem %s0, %s424
        %p426 = pneg %p49
        %p427 = pneg %p46
        %p428 = pneg %p70
        %p429 = pneg %p67
        %p430 = pneg %p91
        %p431 = pneg %p88
        %p432 = pneg %p112
        %p433 = pneg %p109
        %p434 = pneg %p133
        %p435 = pneg %p130
        %p436 = pneg %p154
        %p437 = pneg %p151
        %p438 = pneg %p175
        %p439 = pneg %p172
        %p440 = pneg %p196
        %p441 = pneg %p193
        %p442 = pneg %p217
        %p443 = pneg %p214
        %p444 = pneg %p238
        %p445 = pneg %p235
        %p446 = pneg %p259
        %p447 = pneg %p256
        %p448 = pneg %p280
        %p449 = pneg %p277
        %p450 = pneg %p301
        %p451 = pneg %p298
        %p452 = pneg %p322
        %p453 = pneg %p319
        %p454 = pneg %p348
        %p455 = pneg %p345
        %s456 = sand.u32 %s335, 1
        %s457 = scalar_lea.sflag [#allocation3], %s456
        %s458 = sand.u32 %s335, 1
        %s459 = smul.addr %s458, 128
        %s460 = scalar_lea.vmem [#allocation2], %s459
        %p461 = scmp.lt.s32.totalorder %s28, 1
        %s462 = scalar_select %p461, %s28, 1
        %s463 = smul.addr %s462, 8
        %s464 = smul.addr %s463, 8
        %s465 = scalar_lea.vmem %s0, %s464
        %v466 = vld [vmem:[%s465] sm:$0xff]
        %v467 = vld [vmem:[%s465 + $0x8] sm:$0xff]
        %v468 = vld [vmem:[%s465 + $0x10] sm:$0xff]
        %v469 = vld [vmem:[%s465 + $0x18] sm:$0xff]
        %v470 = vld [vmem:[%s465 + $0x20] sm:$0xff]
        %v471 = vld [vmem:[%s465 + $0x28] sm:$0xff]
        %v472 = vld [vmem:[%s465 + $0x30] sm:$0xff]
        %v473 = vld [vmem:[%s465 + $0x38] sm:$0xff]
        %v474 = vld [vmem:[%s1] sm:$0xff]
        %v475 = vld [vmem:[%s1 + $0x8] sm:$0xff]
        %vm476 = vcmask 261120
        %v478 = vsel %vm476, %v474, 0
        %v481 = vsel %vm476, %v475, 0
        %483 = vmatprep.subr.mxu0 %v467
        %484 = vmatpush1.msra.mxu0 %v466
        %485 = vmatprep.subr.mxu0 %v469
        %486 = vmatpush1.msra.mxu0 %v468
        %487 = vmatprep.subr.mxu0 %v471
        %488 = vmatpush1.msra.mxu0 %v470
        %489 = vmatprep.subr.mxu0 %v473
        %490 = vmatpush1.msra.mxu0 %v472
        %491 = vmatprep.subr.mxu0 0.0
        %492 = vmatpush1.msra.mxu0 0.0
        %493 = vmatprep.subr.mxu0 0.0
        %494 = vmatpush1.msra.mxu0 0.0
        %495 = vmatprep.subr.mxu0 0.0
        %496 = vmatpush1.msra.mxu0 0.0
        %497 = vmatprep.subr.mxu0 0.0
        %498 = vmatpush1.msra.mxu0 0.0
        %499 = vmatprep.subr.mxu0 0.0
        %500 = vmatpush1.msra.mxu0 0.0
        %501 = vmatprep.subr.mxu0 0.0
        %502 = vmatpush1.msra.mxu0 0.0
        %503 = vmatprep.subr.mxu0 0.0
        %504 = vmatpush1.msra.mxu0 0.0
        %505 = vmatprep.subr.mxu0 0.0
        %506 = vmatpush1.msra.mxu0 0.0
        %507 = vmatprep.subr.mxu0 0.0
        %508 = vmatpush1.msra.mxu0 0.0
        %509 = vmatprep.subr.mxu0 0.0
        %510 = vmatpush1.msra.mxu0 0.0
        %511 = vmatprep.subr.mxu0 0.0
        %512 = vmatpush1.msra.mxu0 0.0
        %513 = vmatprep.subr.mxu0 0.0
        %514 = vmatpush1.msra.mxu0 0.0
        %515 = vmatprep.subr.mxu0 0.0
        %516 = vmatpush1.msra.mxu0 0.0
        %517 = vmatprep.subr.mxu0 0.0
        %518 = vmatpush1.msra.mxu0 0.0
        %519 = vmatprep.subr.mxu0 0.0
        %520 = vmatpush1.msra.mxu0 0.0
        %521 = vmatprep.subr.mxu0 0.0
        %522 = vmatpush1.msra.mxu0 0.0
        %523 = vmatprep.subr.mxu0 0.0
        %524 = vmatpush1.msra.mxu0 0.0
        %525 = vmatprep.subr.mxu0 0.0
        %526 = vmatpush1.msra.mxu0 0.0
        %527 = vmatprep.subr.mxu0 0.0
        %528 = vmatpush1.msra.mxu0 0.0
        %529 = vmatprep.subr.mxu0 0.0
        %530 = vmatpush1.msra.mxu0 0.0
        %531 = vmatprep.subr.mxu0 0.0
        %532 = vmatpush1.msra.mxu0 0.0
        %533 = vmatprep.subr.mxu0 0.0
        %534 = vmatpush1.msra.mxu0 0.0
        %535 = vmatprep.subr.mxu0 0.0
        %536 = vmatpush1.msra.mxu0 0.0
        %537 = vmatprep.subr.mxu0 0.0
        %538 = vmatpush1.msra.mxu0 0.0
        %539 = vmatprep.subr.mxu0 0.0
        %540 = vmatpush1.msra.mxu0 0.0
        %541 = vmatprep.subr.mxu0 0.0
        %542 = vmatpush1.msra.mxu0 0.0
        %543 = vmatprep.subr.mxu0 0.0
        %544 = vmatpush1.msra.mxu0 0.0
        %545 = vmatprep.subr.mxu0 0.0
        %546 = vmatpush1.msra.mxu0 0.0
        %547 = vmatprep.mubr.f32.mxu0 0.0
        %548 = vmatmul.mubr.f32.gmra.mrb[0].mxu0 %v478
        %v549 = vpop.f32.mrb[0].mxu0
        %v550 = vadd.f32 0.0, %v549
        %v551 = vpop.f32.mrb[0].mxu0
        %v552 = vadd.f32 0.0, %v551
        %553 = vmatprep.mubr.f32.mxu0 0.0
        %554 = vmatmul.mubr.f32.gmra.mrb[0].mxu0 %v481
        %v555 = vpop.f32.mrb[0].mxu0
        %v556 = vadd.f32 0.0, %v555
        %v557 = vpop.f32.mrb[0].mxu0
        %v558 = vadd.f32 0.0, %v557
        %559 = vdwg.mxu0
        %v560 = vld [vmem:[%s2] sm:$0xff]
        %v561 = vld [vmem:[%s2 + $0x8] sm:$0xff]
        %563 = vset.pattern.permute.xlu0 0
        %564 = vperm.xlu0 %563, %v560
        %v565 = vpop.permute.xlu0 %564
        %568 = vset.pattern.permute.xlu0 0
        %569 = vperm.xlu0 %568, %v561
        %v570 = vpop.permute.xlu0 %569
        %v572 = vmul.f32 %v550, %v565
        %v573 = vmul.f32 %v552, %v565
        %v574 = vmul.f32 %v556, %v570
        %v575 = vmul.f32 %v558, %v570
        %v576 = vld [vmem:[%s3] sm:$0xff]
        %v577 = vld [vmem:[%s3 + $0x8] sm:$0xff]
        %579 = vset.pattern.permute.xlu0 0
        %580 = vperm.xlu0 %579, %v576
        %v581 = vpop.permute.xlu0 %580
        %584 = vset.pattern.permute.xlu0 0
        %585 = vperm.xlu0 %584, %v577
        %v586 = vpop.permute.xlu0 %585
        %v588 = vadd.f32 %v572, %v581
        %v589 = vadd.f32 %v573, %v581
        %v590 = vadd.f32 %v574, %v586
        %v591 = vadd.f32 %v575, %v586
        %v592 = vmax.f32 %v588, 0.0
        %v593 = vmax.f32 %v589, 0.0
        %v594 = vmax.f32 %v590, 0.0
        %v595 = vmax.f32 %v591, 0.0
        %v596 = vld [vmem:[%s12] sm:$0x3]
        %v597 = vld [vmem:[%s13] sm:$0x3]
        %602 = vrot.lane.b32.xlu0 %v592, 17
        %v603 = vpop.permute.xlu0 %602
        %604 = vrot.lane.b32.xlu0 %v593, 17
        %v605 = vpop.permute.xlu0 %604
        %606 = vrot.lane.b32.xlu0 %v594, 17
        %v607 = vpop.permute.xlu0 %606
        %608 = vrot.lane.b32.xlu0 %v595, 17
        %v609 = vpop.permute.xlu0 %608
        %vm610 = vcmask 138240
        %v611 = vsel %vm610, %v603, %v605
        %v612 = vsel %vm610, %v607, %v609
        %v617 = vsel %vm610, 0.0, %v603
        %v618 = vsel %vm610, 0.0, %v607
        %v620 = vlaneseq
        %v621 = vshrl.u32 %v620, 7
        %v622 = vsub.s32 0, %v621
        %v623 = vrot.slane %v596, %v622
        %v624 = vlaneseq
        %v625 = vshrl.u32 %v624, 7
        %v626 = vsub.s32 1, %v625
        %v627 = vrot.slane %v596, %v626
        %v630 = vmul.f32 %v617, %v623
        %v631 = vmul.f32 %v611, %v627
        %v632 = vmul.f32 %v618, %v623
        %v633 = vmul.f32 %v612, %v627
        %v634 = vld [vmem:[%s4] sm:$0xff]
        %v635 = vld [vmem:[%s4 + $0x8] sm:$0xff]
        %636 = vrot.lane.b32.xlu0 %v592, 16
        %v637 = vpop.permute.xlu0 %636
        %638 = vrot.lane.b32.xlu0 %v593, 16
        %v639 = vpop.permute.xlu0 %638
        %640 = vrot.lane.b32.xlu0 %v594, 16
        %v641 = vpop.permute.xlu0 %640
        %642 = vrot.lane.b32.xlu0 %v595, 16
        %v643 = vpop.permute.xlu0 %642
        %vm644 = vcmask 130048
        %v645 = vsel %vm644, %v637, %v639
        %v646 = vsel %vm644, %v641, %v643
        %v651 = vsel %vm644, 0.0, %v637
        %v652 = vsel %vm644, 0.0, %v641
        %s653 = scalar_lea.vmem %s4, 16
        %v654 = vld [vmem:[%s653] sm:$0xff]
        %v655 = vld [vmem:[%s653 + $0x8] sm:$0xff]
        %v657 = vsel %vm644, %v654, 0
        %v660 = vsel %vm644, %v655, 0
        %662 = vmatprep.subr.mxu0 %v645
        %663 = vmatpush1.msra.mxu0 %v651
        %664 = vmatprep.subr.mxu0 %v646
        %665 = vmatpush1.msra.mxu0 %v652
        %666 = vmatprep.subr.mxu0 0.0
        %667 = vmatpush1.msra.mxu0 0.0
        %668 = vmatprep.subr.mxu0 0.0
        %669 = vmatpush1.msra.mxu0 0.0
        %670 = vmatprep.subr.mxu0 0.0
        %671 = vmatpush1.msra.mxu0 0.0
        %672 = vmatprep.subr.mxu0 0.0
        %673 = vmatpush1.msra.mxu0 0.0
        %674 = vmatprep.subr.mxu0 0.0
        %675 = vmatpush1.msra.mxu0 0.0
        %676 = vmatprep.subr.mxu0 0.0
        %677 = vmatpush1.msra.mxu0 0.0
        %678 = vmatprep.subr.mxu0 0.0
        %679 = vmatpush1.msra.mxu0 0.0
        %680 = vmatprep.subr.mxu0 0.0
        %681 = vmatpush1.msra.mxu0 0.0
        %682 = vmatprep.subr.mxu0 0.0
        %683 = vmatpush1.msra.mxu0 0.0
        %684 = vmatprep.subr.mxu0 0.0
        %685 = vmatpush1.msra.mxu0 0.0
        %686 = vmatprep.subr.mxu0 0.0
        %687 = vmatpush1.msra.mxu0 0.0
        %688 = vmatprep.subr.mxu0 0.0
        %689 = vmatpush1.msra.mxu0 0.0
        %690 = vmatprep.subr.mxu0 0.0
        %691 = vmatpush1.msra.mxu0 0.0
        %692 = vmatprep.subr.mxu0 0.0
        %693 = vmatpush1.msra.mxu0 0.0
        %694 = vmatprep.subr.mxu0 0.0
        %695 = vmatpush1.msra.mxu0 0.0
        %696 = vmatprep.subr.mxu0 0.0
        %697 = vmatpush1.msra.mxu0 0.0
        %698 = vmatprep.subr.mxu0 0.0
        %699 = vmatpush1.msra.mxu0 0.0
        %700 = vmatprep.subr.mxu0 0.0
        %701 = vmatpush1.msra.mxu0 0.0
        %702 = vmatprep.subr.mxu0 0.0
        %703 = vmatpush1.msra.mxu0 0.0
        %704 = vmatprep.subr.mxu0 0.0
        %705 = vmatpush1.msra.mxu0 0.0
        %706 = vmatprep.subr.mxu0 0.0
        %707 = vmatpush1.msra.mxu0 0.0
        %708 = vmatprep.subr.mxu0 0.0
        %709 = vmatpush1.msra.mxu0 0.0
        %710 = vmatprep.subr.mxu0 0.0
        %711 = vmatpush1.msra.mxu0 0.0
        %712 = vmatprep.subr.mxu0 0.0
        %713 = vmatpush1.msra.mxu0 0.0
        %714 = vmatprep.subr.mxu0 0.0
        %715 = vmatpush1.msra.mxu0 0.0
        %716 = vmatprep.subr.mxu0 0.0
        %717 = vmatpush1.msra.mxu0 0.0
        %718 = vmatprep.subr.mxu0 0.0
        %719 = vmatpush1.msra.mxu0 0.0
        %720 = vmatprep.subr.mxu0 0.0
        %721 = vmatpush1.msra.mxu0 0.0
        %722 = vmatprep.subr.mxu0 0.0
        %723 = vmatpush1.msra.mxu0 0.0
        %724 = vmatprep.subr.mxu0 0.0
        %725 = vmatpush1.msra.mxu0 0.0
        %726 = vmatprep.mubr.f32.mxu0 0.0
        %727 = vmatmul.mubr.f32.gmra.mrb[0].mxu0 %v657
        %v728 = vpop.f32.mrb[0].mxu0
        %v729 = vadd.f32 0.0, %v728
        %v730 = vpop.f32.mrb[0].mxu0
        %v731 = vadd.f32 0.0, %v730
        %732 = vmatprep.mubr.f32.mxu0 0.0
        %733 = vmatmul.mubr.f32.gmra.mrb[0].mxu0 %v660
        %v734 = vpop.f32.mrb[0].mxu0
        %v735 = vadd.f32 0.0, %v734
        %v736 = vpop.f32.mrb[0].mxu0
        %v737 = vadd.f32 0.0, %v736
        %738 = vdwg.mxu0
        %v740 = vsel %vm644, %v634, 0
        %v743 = vsel %vm644, %v635, 0
        %745 = vmatprep.subr.mxu0 %v631
        %746 = vmatpush1.msra.mxu0 %v630
        %747 = vmatprep.subr.mxu0 %v633
        %748 = vmatpush1.msra.mxu0 %v632
        %749 = vmatprep.subr.mxu0 0.0
        %750 = vmatpush1.msra.mxu0 0.0
        %751 = vmatprep.subr.mxu0 0.0
        %752 = vmatpush1.msra.mxu0 0.0
        %753 = vmatprep.subr.mxu0 0.0
        %754 = vmatpush1.msra.mxu0 0.0
        %755 = vmatprep.subr.mxu0 0.0
        %756 = vmatpush1.msra.mxu0 0.0
        %757 = vmatprep.subr.mxu0 0.0
        %758 = vmatpush1.msra.mxu0 0.0
        %759 = vmatprep.subr.mxu0 0.0
        %760 = vmatpush1.msra.mxu0 0.0
        %761 = vmatprep.subr.mxu0 0.0
        %762 = vmatpush1.msra.mxu0 0.0
        %763 = vmatprep.subr.mxu0 0.0
        %764 = vmatpush1.msra.mxu0 0.0
        %765 = vmatprep.subr.mxu0 0.0
        %766 = vmatpush1.msra.mxu0 0.0
        %767 = vmatprep.subr.mxu0 0.0
        %768 = vmatpush1.msra.mxu0 0.0
        %769 = vmatprep.subr.mxu0 0.0
        %770 = vmatpush1.msra.mxu0 0.0
        %771 = vmatprep.subr.mxu0 0.0
        %772 = vmatpush1.msra.mxu0 0.0
        %773 = vmatprep.subr.mxu0 0.0
        %774 = vmatpush1.msra.mxu0 0.0
        %775 = vmatprep.subr.mxu0 0.0
        %776 = vmatpush1.msra.mxu0 0.0
        %777 = vmatprep.subr.mxu0 0.0
        %778 = vmatpush1.msra.mxu0 0.0
        %779 = vmatprep.subr.mxu0 0.0
        %780 = vmatpush1.msra.mxu0 0.0
        %781 = vmatprep.subr.mxu0 0.0
        %782 = vmatpush1.msra.mxu0 0.0
        %783 = vmatprep.subr.mxu0 0.0
        %784 = vmatpush1.msra.mxu0 0.0
        %785 = vmatprep.subr.mxu0 0.0
        %786 = vmatpush1.msra.mxu0 0.0
        %787 = vmatprep.subr.mxu0 0.0
        %788 = vmatpush1.msra.mxu0 0.0
        %789 = vmatprep.subr.mxu0 0.0
        %790 = vmatpush1.msra.mxu0 0.0
        %791 = vmatprep.subr.mxu0 0.0
        %792 = vmatpush1.msra.mxu0 0.0
        %793 = vmatprep.subr.mxu0 0.0
        %794 = vmatpush1.msra.mxu0 0.0
        %795 = vmatprep.subr.mxu0 0.0
        %796 = vmatpush1.msra.mxu0 0.0
        %797 = vmatprep.subr.mxu0 0.0
        %798 = vmatpush1.msra.mxu0 0.0
        %799 = vmatprep.subr.mxu0 0.0
        %800 = vmatpush1.msra.mxu0 0.0
        %801 = vmatprep.subr.mxu0 0.0
        %802 = vmatpush1.msra.mxu0 0.0
        %803 = vmatprep.subr.mxu0 0.0
        %804 = vmatpush1.msra.mxu0 0.0
        %805 = vmatprep.subr.mxu0 0.0
        %806 = vmatpush1.msra.mxu0 0.0
        %807 = vmatprep.subr.mxu0 0.0
        %808 = vmatpush1.msra.mxu0 0.0
        %809 = vmatprep.mubr.f32.mxu0 0.0
        %810 = vmatmul.mubr.f32.gmra.mrb[0].mxu0 %v740
        %v811 = vpop.f32.mrb[0].mxu0
        %v812 = vadd.f32 %v729, %v811
        %v813 = vpop.f32.mrb[0].mxu0
        %v814 = vadd.f32 %v731, %v813
        %815 = vmatprep.mubr.f32.mxu0 0.0
        %816 = vmatmul.mubr.f32.gmra.mrb[0].mxu0 %v743
        %v817 = vpop.f32.mrb[0].mxu0
        %v818 = vadd.f32 %v735, %v817
        %v819 = vpop.f32.mrb[0].mxu0
        %v820 = vadd.f32 %v737, %v819
        %821 = vdwg.mxu0
        %822 = vrot.lane.b32.xlu0 %v592, 15
        %v823 = vpop.permute.xlu0 %822
        %824 = vrot.lane.b32.xlu0 %v593, 15
        %v825 = vpop.permute.xlu0 %824
        %826 = vrot.lane.b32.xlu0 %v594, 15
        %v827 = vpop.permute.xlu0 %826
        %828 = vrot.lane.b32.xlu0 %v595, 15
        %v829 = vpop.permute.xlu0 %828
        %vm830 = vcmask 121856
        %v831 = vsel %vm830, %v823, %v825
        %v832 = vsel %vm830, %v827, %v829
        %v837 = vsel %vm830, 0.0, %v823
        %v838 = vsel %vm830, 0.0, %v827
        %v840 = vlaneseq
        %v841 = vshrl.u32 %v840, 7
        %v842 = vsub.s32 0, %v841
        %v843 = vrot.slane %v597, %v842
        %v844 = vlaneseq
        %v845 = vshrl.u32 %v844, 7
        %v846 = vsub.s32 1, %v845
        %v847 = vrot.slane %v597, %v846
        %v850 = vmul.f32 %v837, %v843
        %v851 = vmul.f32 %v831, %v847
        %v852 = vmul.f32 %v838, %v843
        %v853 = vmul.f32 %v832, %v847
        %s854 = scalar_lea.vmem %s4, 32
        %v855 = vld [vmem:[%s854] sm:$0xff]
        %v856 = vld [vmem:[%s854 + $0x8] sm:$0xff]
        %v858 = vsel %vm644, %v855, 0
        %v861 = vsel %vm644, %v856, 0
        %863 = vmatprep.subr.mxu0 %v851
        %864 = vmatpush1.msra.mxu0 %v850
        %865 = vmatprep.subr.mxu0 %v853
        %866 = vmatpush1.msra.mxu0 %v852
        %867 = vmatprep.subr.mxu0 0.0
        %868 = vmatpush1.msra.mxu0 0.0
        %869 = vmatprep.subr.mxu0 0.0
        %870 = vmatpush1.msra.mxu0 0.0
        %871 = vmatprep.subr.mxu0 0.0
        %872 = vmatpush1.msra.mxu0 0.0
        %873 = vmatprep.subr.mxu0 0.0
        %874 = vmatpush1.msra.mxu0 0.0
        %875 = vmatprep.subr.mxu0 0.0
        %876 = vmatpush1.msra.mxu0 0.0
        %877 = vmatprep.subr.mxu0 0.0
        %878 = vmatpush1.msra.mxu0 0.0
        %879 = vmatprep.subr.mxu0 0.0
        %880 = vmatpush1.msra.mxu0 0.0
        %881 = vmatprep.subr.mxu0 0.0
        %882 = vmatpush1.msra.mxu0 0.0
        %883 = vmatprep.subr.mxu0 0.0
        %884 = vmatpush1.msra.mxu0 0.0
        %885 = vmatprep.subr.mxu0 0.0
        %886 = vmatpush1.msra.mxu0 0.0
        %887 = vmatprep.subr.mxu0 0.0
        %888 = vmatpush1.msra.mxu0 0.0
        %889 = vmatprep.subr.mxu0 0.0
        %890 = vmatpush1.msra.mxu0 0.0
        %891 = vmatprep.subr.mxu0 0.0
        %892 = vmatpush1.msra.mxu0 0.0
        %893 = vmatprep.subr.mxu0 0.0
        %894 = vmatpush1.msra.mxu0 0.0
        %895 = vmatprep.subr.mxu0 0.0
        %896 = vmatpush1.msra.mxu0 0.0
        %897 = vmatprep.subr.mxu0 0.0
        %898 = vmatpush1.msra.mxu0 0.0
        %899 = vmatprep.subr.mxu0 0.0
        %900 = vmatpush1.msra.mxu0 0.0
        %901 = vmatprep.subr.mxu0 0.0
        %902 = vmatpush1.msra.mxu0 0.0
        %903 = vmatprep.subr.mxu0 0.0
        %904 = vmatpush1.msra.mxu0 0.0
        %905 = vmatprep.subr.mxu0 0.0
        %906 = vmatpush1.msra.mxu0 0.0
        %907 = vmatprep.subr.mxu0 0.0
        %908 = vmatpush1.msra.mxu0 0.0
        %909 = vmatprep.subr.mxu0 0.0
        %910 = vmatpush1.msra.mxu0 0.0
        %911 = vmatprep.subr.mxu0 0.0
        %912 = vmatpush1.msra.mxu0 0.0
        %913 = vmatprep.subr.mxu0 0.0
        %914 = vmatpush1.msra.mxu0 0.0
        %915 = vmatprep.subr.mxu0 0.0
        %916 = vmatpush1.msra.mxu0 0.0
        %917 = vmatprep.subr.mxu0 0.0
        %918 = vmatpush1.msra.mxu0 0.0
        %919 = vmatprep.subr.mxu0 0.0
        %920 = vmatpush1.msra.mxu0 0.0
        %921 = vmatprep.subr.mxu0 0.0
        %922 = vmatpush1.msra.mxu0 0.0
        %923 = vmatprep.subr.mxu0 0.0
        %924 = vmatpush1.msra.mxu0 0.0
        %925 = vmatprep.subr.mxu0 0.0
        %926 = vmatpush1.msra.mxu0 0.0
        %927 = vmatprep.mubr.f32.mxu0 0.0
        %928 = vmatmul.mubr.f32.gmra.mrb[0].mxu0 %v858
        %v929 = vpop.f32.mrb[0].mxu0
        %v930 = vadd.f32 0.0, %v929
        %v931 = vpop.f32.mrb[0].mxu0
        %v932 = vadd.f32 0.0, %v931
        %933 = vmatprep.mubr.f32.mxu0 0.0
        %934 = vmatmul.mubr.f32.gmra.mrb[0].mxu0 %v861
        %v935 = vpop.f32.mrb[0].mxu0
        %v936 = vadd.f32 0.0, %v935
        %v937 = vpop.f32.mrb[0].mxu0
        %v938 = vadd.f32 0.0, %v937
        %939 = vdwg.mxu0
        %v940 = vadd.f32 %v812, %v930
        %v941 = vadd.f32 %v814, %v932
        %v942 = vadd.f32 %v818, %v936
        %v943 = vadd.f32 %v820, %v938
        %944 = vrot.lane.b32.xlu0 %v592, 1
        %v945 = vpop.permute.xlu0 %944
        %946 = vrot.lane.b32.xlu0 %v593, 1
        %v947 = vpop.permute.xlu0 %946
        %948 = vrot.lane.b32.xlu0 %v594, 1
        %v949 = vpop.permute.xlu0 %948
        %950 = vrot.lane.b32.xlu0 %v595, 1
        %v951 = vpop.permute.xlu0 %950
        %vm952 = vcmask 7168
        %v953 = vsel %vm952, %v945, %v947
        %v954 = vsel %vm952, %v949, %v951
        %v959 = vsel %vm952, 0.0, %v945
        %v960 = vsel %vm952, 0.0, %v949
        %v961 = vmul.f32 %v959, %v623
        %v962 = vmul.f32 %v953, %v627
        %v963 = vmul.f32 %v960, %v623
        %v964 = vmul.f32 %v954, %v627
        %s965 = scalar_lea.vmem %s4, 48
        %v966 = vld [vmem:[%s965] sm:$0xff]
        %v967 = vld [vmem:[%s965 + $0x8] sm:$0xff]
        %v969 = vsel %vm644, %v966, 0
        %v972 = vsel %vm644, %v967, 0
        %974 = vmatprep.subr.mxu0 %v962
        %975 = vmatpush1.msra.mxu0 %v961
        %976 = vmatprep.subr.mxu0 %v964
        %977 = vmatpush1.msra.mxu0 %v963
        %978 = vmatprep.subr.mxu0 0.0
        %979 = vmatpush1.msra.mxu0 0.0
        %980 = vmatprep.subr.mxu0 0.0
        %981 = vmatpush1.msra.mxu0 0.0
        %982 = vmatprep.subr.mxu0 0.0
        %983 = vmatpush1.msra.mxu0 0.0
        %984 = vmatprep.subr.mxu0 0.0
        %985 = vmatpush1.msra.mxu0 0.0
        %986 = vmatprep.subr.mxu0 0.0
        %987 = vmatpush1.msra.mxu0 0.0
        %988 = vmatprep.subr.mxu0 0.0
        %989 = vmatpush1.msra.mxu0 0.0
        %990 = vmatprep.subr.mxu0 0.0
        %991 = vmatpush1.msra.mxu0 0.0
        %992 = vmatprep.subr.mxu0 0.0
        %993 = vmatpush1.msra.mxu0 0.0
        %994 = vmatprep.subr.mxu0 0.0
        %995 = vmatpush1.msra.mxu0 0.0
        %996 = vmatprep.subr.mxu0 0.0
        %997 = vmatpush1.msra.mxu0 0.0
        %998 = vmatprep.subr.mxu0 0.0
        %999 = vmatpush1.msra.mxu0 0.0
        %1000 = vmatprep.subr.mxu0 0.0
        %1001 = vmatpush1.msra.mxu0 0.0
        %1002 = vmatprep.subr.mxu0 0.0
        %1003 = vmatpush1.msra.mxu0 0.0
        %1004 = vmatprep.subr.mxu0 0.0
        %1005 = vmatpush1.msra.mxu0 0.0
        %1006 = vmatprep.subr.mxu0 0.0
        %1007 = vmatpush1.msra.mxu0 0.0
        %1008 = vmatprep.subr.mxu0 0.0
        %1009 = vmatpush1.msra.mxu0 0.0
        %1010 = vmatprep.subr.mxu0 0.0
        %1011 = vmatpush1.msra.mxu0 0.0
        %1012 = vmatprep.subr.mxu0 0.0
        %1013 = vmatpush1.msra.mxu0 0.0
        %1014 = vmatprep.subr.mxu0 0.0
        %1015 = vmatpush1.msra.mxu0 0.0
        %1016 = vmatprep.subr.mxu0 0.0
        %1017 = vmatpush1.msra.mxu0 0.0
        %1018 = vmatprep.subr.mxu0 0.0
        %1019 = vmatpush1.msra.mxu0 0.0
        %1020 = vmatprep.subr.mxu0 0.0
        %1021 = vmatpush1.msra.mxu0 0.0
        %1022 = vmatprep.subr.mxu0 0.0
        %1023 = vmatpush1.msra.mxu0 0.0
        %1024 = vmatprep.subr.mxu0 0.0
        %1025 = vmatpush1.msra.mxu0 0.0
        %1026 = vmatprep.subr.mxu0 0.0
        %1027 = vmatpush1.msra.mxu0 0.0
        %1028 = vmatprep.subr.mxu0 0.0
        %1029 = vmatpush1.msra.mxu0 0.0
        %1030 = vmatprep.subr.mxu0 0.0
        %1031 = vmatpush1.msra.mxu0 0.0
        %1032 = vmatprep.subr.mxu0 0.0
        %1033 = vmatpush1.msra.mxu0 0.0
        %1034 = vmatprep.subr.mxu0 0.0
        %1035 = vmatpush1.msra.mxu0 0.0
        %1036 = vmatprep.subr.mxu0 0.0
        %1037 = vmatpush1.msra.mxu0 0.0
        %1038 = vmatprep.mubr.f32.mxu0 0.0
        %1039 = vmatmul.mubr.f32.gmra.mrb[0].mxu0 %v969
        %v1040 = vpop.f32.mrb[0].mxu0
        %v1041 = vadd.f32 0.0, %v1040
        %v1042 = vpop.f32.mrb[0].mxu0
        %v1043 = vadd.f32 0.0, %v1042
        %1044 = vmatprep.mubr.f32.mxu0 0.0
        %1045 = vmatmul.mubr.f32.gmra.mrb[0].mxu0 %v972
        %v1046 = vpop.f32.mrb[0].mxu0
        %v1047 = vadd.f32 0.0, %v1046
        %v1048 = vpop.f32.mrb[0].mxu0
        %v1049 = vadd.f32 0.0, %v1048
        %1050 = vdwg.mxu0
        %v1051 = vadd.f32 %v940, %v1041
        %v1052 = vadd.f32 %v941, %v1043
        %v1053 = vadd.f32 %v942, %v1047
        %v1054 = vadd.f32 %v943, %v1049
        %s1055 = scalar_lea.vmem %s4, 64
        %v1056 = vld [vmem:[%s1055] sm:$0xff]
        %v1057 = vld [vmem:[%s1055 + $0x8] sm:$0xff]
        %v1059 = vsel %vm644, %v1056, 0
        %v1062 = vsel %vm644, %v1057, 0
        %1064 = vmatprep.subr.mxu0 %v593
        %1065 = vmatpush1.msra.mxu0 %v592
        %1066 = vmatprep.subr.mxu0 %v595
        %1067 = vmatpush1.msra.mxu0 %v594
        %1068 = vmatprep.subr.mxu0 0.0
        %1069 = vmatpush1.msra.mxu0 0.0
        %1070 = vmatprep.subr.mxu0 0.0
        %1071 = vmatpush1.msra.mxu0 0.0
        %1072 = vmatprep.subr.mxu0 0.0
        %1073 = vmatpush1.msra.mxu0 0.0
        %1074 = vmatprep.subr.mxu0 0.0
        %1075 = vmatpush1.msra.mxu0 0.0
        %1076 = vmatprep.subr.mxu0 0.0
        %1077 = vmatpush1.msra.mxu0 0.0
        %1078 = vmatprep.subr.mxu0 0.0
        %1079 = vmatpush1.msra.mxu0 0.0
        %1080 = vmatprep.subr.mxu0 0.0
        %1081 = vmatpush1.msra.mxu0 0.0
        %1082 = vmatprep.subr.mxu0 0.0
        %1083 = vmatpush1.msra.mxu0 0.0
        %1084 = vmatprep.subr.mxu0 0.0
        %1085 = vmatpush1.msra.mxu0 0.0
        %1086 = vmatprep.subr.mxu0 0.0
        %1087 = vmatpush1.msra.mxu0 0.0
        %1088 = vmatprep.subr.mxu0 0.0
        %1089 = vmatpush1.msra.mxu0 0.0
        %1090 = vmatprep.subr.mxu0 0.0
        %1091 = vmatpush1.msra.mxu0 0.0
        %1092 = vmatprep.subr.mxu0 0.0
        %1093 = vmatpush1.msra.mxu0 0.0
        %1094 = vmatprep.subr.mxu0 0.0
        %1095 = vmatpush1.msra.mxu0 0.0
        %1096 = vmatprep.subr.mxu0 0.0
        %1097 = vmatpush1.msra.mxu0 0.0
        %1098 = vmatprep.subr.mxu0 0.0
        %1099 = vmatpush1.msra.mxu0 0.0
        %1100 = vmatprep.subr.mxu0 0.0
        %1101 = vmatpush1.msra.mxu0 0.0
        %1102 = vmatprep.subr.mxu0 0.0
        %1103 = vmatpush1.msra.mxu0 0.0
        %1104 = vmatprep.subr.mxu0 0.0
        %1105 = vmatpush1.msra.mxu0 0.0
        %1106 = vmatprep.subr.mxu0 0.0
        %1107 = vmatpush1.msra.mxu0 0.0
        %1108 = vmatprep.subr.mxu0 0.0
        %1109 = vmatpush1.msra.mxu0 0.0
        %1110 = vmatprep.subr.mxu0 0.0
        %1111 = vmatpush1.msra.mxu0 0.0
        %1112 = vmatprep.subr.mxu0 0.0
        %1113 = vmatpush1.msra.mxu0 0.0
        %1114 = vmatprep.subr.mxu0 0.0
        %1115 = vmatpush1.msra.mxu0 0.0
        %1116 = vmatprep.subr.mxu0 0.0
        %1117 = vmatpush1.msra.mxu0 0.0
        %1118 = vmatprep.subr.mxu0 0.0
        %1119 = vmatpush1.msra.mxu0 0.0
        %1120 = vmatprep.subr.mxu0 0.0
        %1121 = vmatpush1.msra.mxu0 0.0
        %1122 = vmatprep.subr.mxu0 0.0
        %1123 = vmatpush1.msra.mxu0 0.0
        %1124 = vmatprep.subr.mxu0 0.0
        %1125 = vmatpush1.msra.mxu0 0.0
        %1126 = vmatprep.subr.mxu0 0.0
        %1127 = vmatpush1.msra.mxu0 0.0
        %1128 = vmatprep.mubr.f32.mxu0 0.0
        %1129 = vmatmul.mubr.f32.gmra.mrb[0].mxu0 %v1059
        %v1130 = vpop.f32.mrb[0].mxu0
        %v1131 = vadd.f32 0.0, %v1130
        %v1132 = vpop.f32.mrb[0].mxu0
        %v1133 = vadd.f32 0.0, %v1132
        %1134 = vmatprep.mubr.f32.mxu0 0.0
        %1135 = vmatmul.mubr.f32.gmra.mrb[0].mxu0 %v1062
        %v1136 = vpop.f32.mrb[0].mxu0
        %v1137 = vadd.f32 0.0, %v1136
        %v1138 = vpop.f32.mrb[0].mxu0
        %v1139 = vadd.f32 0.0, %v1138
        %1140 = vdwg.mxu0
        %v1141 = vadd.f32 %v1051, %v1131
        %v1142 = vadd.f32 %v1052, %v1133
        %v1143 = vadd.f32 %v1053, %v1137
        %v1144 = vadd.f32 %v1054, %v1139
        %1145 = vrot.lane.b32.xlu0 %v592, 127
        %v1146 = vpop.permute.xlu0 %1145
        %1147 = vrot.lane.b32.xlu0 %v593, 127
        %v1148 = vpop.permute.xlu0 %1147
        %1149 = vrot.lane.b32.xlu0 %v594, 127
        %v1150 = vpop.permute.xlu0 %1149
        %1151 = vrot.lane.b32.xlu0 %v595, 127
        %v1152 = vpop.permute.xlu0 %1151
        %vm1153 = vcmask 1039360
        %v1154 = vsel %vm1153, %v1146, %v1148
        %v1155 = vsel %vm1153, %v1150, %v1152
        %v1160 = vsel %vm1153, %v1148, 0.0
        %v1161 = vsel %vm1153, %v1152, 0.0
        %v1162 = vmul.f32 %v1154, %v843
        %v1163 = vmul.f32 %v1160, %v847
        %v1164 = vmul.f32 %v1155, %v843
        %v1165 = vmul.f32 %v1161, %v847
        %s1166 = scalar_lea.vmem %s4, 80
        %v1167 = vld [vmem:[%s1166] sm:$0xff]
        %v1168 = vld [vmem:[%s1166 + $0x8] sm:$0xff]
        %v1170 = vsel %vm644, %v1167, 0
        %v1173 = vsel %vm644, %v1168, 0
        %1175 = vmatprep.subr.mxu0 %v1163
        %1176 = vmatpush1.msra.mxu0 %v1162
        %1177 = vmatprep.subr.mxu0 %v1165
        %1178 = vmatpush1.msra.mxu0 %v1164
        %1179 = vmatprep.subr.mxu0 0.0
        %1180 = vmatpush1.msra.mxu0 0.0
        %1181 = vmatprep.subr.mxu0 0.0
        %1182 = vmatpush1.msra.mxu0 0.0
        %1183 = vmatprep.subr.mxu0 0.0
        %1184 = vmatpush1.msra.mxu0 0.0
        %1185 = vmatprep.subr.mxu0 0.0
        %1186 = vmatpush1.msra.mxu0 0.0
        %1187 = vmatprep.subr.mxu0 0.0
        %1188 = vmatpush1.msra.mxu0 0.0
        %1189 = vmatprep.subr.mxu0 0.0
        %1190 = vmatpush1.msra.mxu0 0.0
        %1191 = vmatprep.subr.mxu0 0.0
        %1192 = vmatpush1.msra.mxu0 0.0
        %1193 = vmatprep.subr.mxu0 0.0
        %1194 = vmatpush1.msra.mxu0 0.0
        %1195 = vmatprep.subr.mxu0 0.0
        %1196 = vmatpush1.msra.mxu0 0.0
        %1197 = vmatprep.subr.mxu0 0.0
        %1198 = vmatpush1.msra.mxu0 0.0
        %1199 = vmatprep.subr.mxu0 0.0
        %1200 = vmatpush1.msra.mxu0 0.0
        %1201 = vmatprep.subr.mxu0 0.0
        %1202 = vmatpush1.msra.mxu0 0.0
        %1203 = vmatprep.subr.mxu0 0.0
        %1204 = vmatpush1.msra.mxu0 0.0
        %1205 = vmatprep.subr.mxu0 0.0
        %1206 = vmatpush1.msra.mxu0 0.0
        %1207 = vmatprep.subr.mxu0 0.0
        %1208 = vmatpush1.msra.mxu0 0.0
        %1209 = vmatprep.subr.mxu0 0.0
        %1210 = vmatpush1.msra.mxu0 0.0
        %1211 = vmatprep.subr.mxu0 0.0
        %1212 = vmatpush1.msra.mxu0 0.0
        %1213 = vmatprep.subr.mxu0 0.0
        %1214 = vmatpush1.msra.mxu0 0.0
        %1215 = vmatprep.subr.mxu0 0.0
        %1216 = vmatpush1.msra.mxu0 0.0
        %1217 = vmatprep.subr.mxu0 0.0
        %1218 = vmatpush1.msra.mxu0 0.0
        %1219 = vmatprep.subr.mxu0 0.0
        %1220 = vmatpush1.msra.mxu0 0.0
        %1221 = vmatprep.subr.mxu0 0.0
        %1222 = vmatpush1.msra.mxu0 0.0
        %1223 = vmatprep.subr.mxu0 0.0
        %1224 = vmatpush1.msra.mxu0 0.0
        %1225 = vmatprep.subr.mxu0 0.0
        %1226 = vmatpush1.msra.mxu0 0.0
        %1227 = vmatprep.subr.mxu0 0.0
        %1228 = vmatpush1.msra.mxu0 0.0
        %1229 = vmatprep.subr.mxu0 0.0
        %1230 = vmatpush1.msra.mxu0 0.0
        %1231 = vmatprep.subr.mxu0 0.0
        %1232 = vmatpush1.msra.mxu0 0.0
        %1233 = vmatprep.subr.mxu0 0.0
        %1234 = vmatpush1.msra.mxu0 0.0
        %1235 = vmatprep.subr.mxu0 0.0
        %1236 = vmatpush1.msra.mxu0 0.0
        %1237 = vmatprep.subr.mxu0 0.0
        %1238 = vmatpush1.msra.mxu0 0.0
        %1239 = vmatprep.mubr.f32.mxu0 0.0
        %1240 = vmatmul.mubr.f32.gmra.mrb[0].mxu0 %v1170
        %v1241 = vpop.f32.mrb[0].mxu0
        %v1242 = vadd.f32 0.0, %v1241
        %v1243 = vpop.f32.mrb[0].mxu0
        %v1244 = vadd.f32 0.0, %v1243
        %1245 = vmatprep.mubr.f32.mxu0 0.0
        %1246 = vmatmul.mubr.f32.gmra.mrb[0].mxu0 %v1173
        %v1247 = vpop.f32.mrb[0].mxu0
        %v1248 = vadd.f32 0.0, %v1247
        %v1249 = vpop.f32.mrb[0].mxu0
        %v1250 = vadd.f32 0.0, %v1249
        %1251 = vdwg.mxu0
        %v1252 = vadd.f32 %v1141, %v1242
        %v1253 = vadd.f32 %v1142, %v1244
        %v1254 = vadd.f32 %v1143, %v1248
        %v1255 = vadd.f32 %v1144, %v1250
        %1256 = vrot.lane.b32.xlu0 %v592, 113
        %v1257 = vpop.permute.xlu0 %1256
        %1258 = vrot.lane.b32.xlu0 %v593, 113
        %v1259 = vpop.permute.xlu0 %1258
        %1260 = vrot.lane.b32.xlu0 %v594, 113
        %v1261 = vpop.permute.xlu0 %1260
        %1262 = vrot.lane.b32.xlu0 %v595, 113
        %v1263 = vpop.permute.xlu0 %1262
        %vm1264 = vcmask 924672
        %v1265 = vsel %vm1264, %v1257, %v1259
        %v1266 = vsel %vm1264, %v1261, %v1263
        %v1271 = vsel %vm1264, %v1259, 0.0
        %v1272 = vsel %vm1264, %v1263, 0.0
        %v1273 = vmul.f32 %v1265, %v623
        %v1274 = vmul.f32 %v1271, %v627
        %v1275 = vmul.f32 %v1266, %v623
        %v1276 = vmul.f32 %v1272, %v627
        %s1277 = scalar_lea.vmem %s4, 96
        %v1278 = vld [vmem:[%s1277] sm:$0xff]
        %v1279 = vld [vmem:[%s1277 + $0x8] sm:$0xff]
        %v1281 = vsel %vm644, %v1278, 0
        %v1284 = vsel %vm644, %v1279, 0
        %1286 = vmatprep.subr.mxu0 %v1274
        %1287 = vmatpush1.msra.mxu0 %v1273
        %1288 = vmatprep.subr.mxu0 %v1276
        %1289 = vmatpush1.msra.mxu0 %v1275
        %1290 = vmatprep.subr.mxu0 0.0
        %1291 = vmatpush1.msra.mxu0 0.0
        %1292 = vmatprep.subr.mxu0 0.0
        %1293 = vmatpush1.msra.mxu0 0.0
        %1294 = vmatprep.subr.mxu0 0.0
        %1295 = vmatpush1.msra.mxu0 0.0
        %1296 = vmatprep.subr.mxu0 0.0
        %1297 = vmatpush1.msra.mxu0 0.0
        %1298 = vmatprep.subr.mxu0 0.0
        %1299 = vmatpush1.msra.mxu0 0.0
        %1300 = vmatprep.subr.mxu0 0.0
        %1301 = vmatpush1.msra.mxu0 0.0
        %1302 = vmatprep.subr.mxu0 0.0
        %1303 = vmatpush1.msra.mxu0 0.0
        %1304 = vmatprep.subr.mxu0 0.0
        %1305 = vmatpush1.msra.mxu0 0.0
        %1306 = vmatprep.subr.mxu0 0.0
        %1307 = vmatpush1.msra.mxu0 0.0
        %1308 = vmatprep.subr.mxu0 0.0
        %1309 = vmatpush1.msra.mxu0 0.0
        %1310 = vmatprep.subr.mxu0 0.0
        %1311 = vmatpush1.msra.mxu0 0.0
        %1312 = vmatprep.subr.mxu0 0.0
        %1313 = vmatpush1.msra.mxu0 0.0
        %1314 = vmatprep.subr.mxu0 0.0
        %1315 = vmatpush1.msra.mxu0 0.0
        %1316 = vmatprep.subr.mxu0 0.0
        %1317 = vmatpush1.msra.mxu0 0.0
        %1318 = vmatprep.subr.mxu0 0.0
        %1319 = vmatpush1.msra.mxu0 0.0
        %1320 = vmatprep.subr.mxu0 0.0
        %1321 = vmatpush1.msra.mxu0 0.0
        %1322 = vmatprep.subr.mxu0 0.0
        %1323 = vmatpush1.msra.mxu0 0.0
        %1324 = vmatprep.subr.mxu0 0.0
        %1325 = vmatpush1.msra.mxu0 0.0
        %1326 = vmatprep.subr.mxu0 0.0
        %1327 = vmatpush1.msra.mxu0 0.0
        %1328 = vmatprep.subr.mxu0 0.0
        %1329 = vmatpush1.msra.mxu0 0.0
        %1330 = vmatprep.subr.mxu0 0.0
        %1331 = vmatpush1.msra.mxu0 0.0
        %1332 = vmatprep.subr.mxu0 0.0
        %1333 = vmatpush1.msra.mxu0 0.0
        %1334 = vmatprep.subr.mxu0 0.0
        %1335 = vmatpush1.msra.mxu0 0.0
        %1336 = vmatprep.subr.mxu0 0.0
        %1337 = vmatpush1.msra.mxu0 0.0
        %1338 = vmatprep.subr.mxu0 0.0
        %1339 = vmatpush1.msra.mxu0 0.0
        %1340 = vmatprep.subr.mxu0 0.0
        %1341 = vmatpush1.msra.mxu0 0.0
        %1342 = vmatprep.subr.mxu0 0.0
        %1343 = vmatpush1.msra.mxu0 0.0
        %1344 = vmatprep.subr.mxu0 0.0
        %1345 = vmatpush1.msra.mxu0 0.0
        %1346 = vmatprep.subr.mxu0 0.0
        %1347 = vmatpush1.msra.mxu0 0.0
        %1348 = vmatprep.subr.mxu0 0.0
        %1349 = vmatpush1.msra.mxu0 0.0
        %1350 = vmatprep.mubr.f32.mxu0 0.0
        %1351 = vmatmul.mubr.f32.gmra.mrb[0].mxu0 %v1281
        %v1352 = vpop.f32.mrb[0].mxu0
        %v1353 = vadd.f32 0.0, %v1352
        %v1354 = vpop.f32.mrb[0].mxu0
        %v1355 = vadd.f32 0.0, %v1354
        %1356 = vmatprep.mubr.f32.mxu0 0.0
        %1357 = vmatmul.mubr.f32.gmra.mrb[0].mxu0 %v1284
        %v1358 = vpop.f32.mrb[0].mxu0
        %v1359 = vadd.f32 0.0, %v1358
        %v1360 = vpop.f32.mrb[0].mxu0
        %v1361 = vadd.f32 0.0, %v1360
        %1362 = vdwg.mxu0
        %v1363 = vadd.f32 %v1252, %v1353
        %v1364 = vadd.f32 %v1253, %v1355
        %v1365 = vadd.f32 %v1254, %v1359
        %v1366 = vadd.f32 %v1255, %v1361
        %1367 = vrot.lane.b32.xlu0 %v592, 112
        %v1368 = vpop.permute.xlu0 %1367
        %1369 = vrot.lane.b32.xlu0 %v593, 112
        %v1370 = vpop.permute.xlu0 %1369
        %1371 = vrot.lane.b32.xlu0 %v594, 112
        %v1372 = vpop.permute.xlu0 %1371
        %1373 = vrot.lane.b32.xlu0 %v595, 112
        %v1374 = vpop.permute.xlu0 %1373
        %vm1375 = vcmask 916480
        %v1376 = vsel %vm1375, %v1368, %v1370
        %v1377 = vsel %vm1375, %v1372, %v1374
        %v1382 = vsel %vm1375, %v1370, 0.0
        %v1383 = vsel %vm1375, %v1374, 0.0
        %s1384 = scalar_lea.vmem %s4, 112
        %v1385 = vld [vmem:[%s1384] sm:$0xff]
        %v1386 = vld [vmem:[%s1384 + $0x8] sm:$0xff]
        %v1388 = vsel %vm644, %v1385, 0
        %v1391 = vsel %vm644, %v1386, 0
        %1393 = vmatprep.subr.mxu0 %v1382
        %1394 = vmatpush1.msra.mxu0 %v1376
        %1395 = vmatprep.subr.mxu0 %v1383
        %1396 = vmatpush1.msra.mxu0 %v1377
        %1397 = vmatprep.subr.mxu0 0.0
        %1398 = vmatpush1.msra.mxu0 0.0
        %1399 = vmatprep.subr.mxu0 0.0
        %1400 = vmatpush1.msra.mxu0 0.0
        %1401 = vmatprep.subr.mxu0 0.0
        %1402 = vmatpush1.msra.mxu0 0.0
        %1403 = vmatprep.subr.mxu0 0.0
        %1404 = vmatpush1.msra.mxu0 0.0
        %1405 = vmatprep.subr.mxu0 0.0
        %1406 = vmatpush1.msra.mxu0 0.0
        %1407 = vmatprep.subr.mxu0 0.0
        %1408 = vmatpush1.msra.mxu0 0.0
        %1409 = vmatprep.subr.mxu0 0.0
        %1410 = vmatpush1.msra.mxu0 0.0
        %1411 = vmatprep.subr.mxu0 0.0
        %1412 = vmatpush1.msra.mxu0 0.0
        %1413 = vmatprep.subr.mxu0 0.0
        %1414 = vmatpush1.msra.mxu0 0.0
        %1415 = vmatprep.subr.mxu0 0.0
        %1416 = vmatpush1.msra.mxu0 0.0
        %1417 = vmatprep.subr.mxu0 0.0
        %1418 = vmatpush1.msra.mxu0 0.0
        %1419 = vmatprep.subr.mxu0 0.0
        %1420 = vmatpush1.msra.mxu0 0.0
        %1421 = vmatprep.subr.mxu0 0.0
        %1422 = vmatpush1.msra.mxu0 0.0
        %1423 = vmatprep.subr.mxu0 0.0
        %1424 = vmatpush1.msra.mxu0 0.0
        %1425 = vmatprep.subr.mxu0 0.0
        %1426 = vmatpush1.msra.mxu0 0.0
        %1427 = vmatprep.subr.mxu0 0.0
        %1428 = vmatpush1.msra.mxu0 0.0
        %1429 = vmatprep.subr.mxu0 0.0
        %1430 = vmatpush1.msra.mxu0 0.0
        %1431 = vmatprep.subr.mxu0 0.0
        %1432 = vmatpush1.msra.mxu0 0.0
        %1433 = vmatprep.subr.mxu0 0.0
        %1434 = vmatpush1.msra.mxu0 0.0
        %1435 = vmatprep.subr.mxu0 0.0
        %1436 = vmatpush1.msra.mxu0 0.0
        %1437 = vmatprep.subr.mxu0 0.0
        %1438 = vmatpush1.msra.mxu0 0.0
        %1439 = vmatprep.subr.mxu0 0.0
        %1440 = vmatpush1.msra.mxu0 0.0
        %1441 = vmatprep.subr.mxu0 0.0
        %1442 = vmatpush1.msra.mxu0 0.0
        %1443 = vmatprep.subr.mxu0 0.0
        %1444 = vmatpush1.msra.mxu0 0.0
        %1445 = vmatprep.subr.mxu0 0.0
        %1446 = vmatpush1.msra.mxu0 0.0
        %1447 = vmatprep.subr.mxu0 0.0
        %1448 = vmatpush1.msra.mxu0 0.0
        %1449 = vmatprep.subr.mxu0 0.0
        %1450 = vmatpush1.msra.mxu0 0.0
        %1451 = vmatprep.subr.mxu0 0.0
        %1452 = vmatpush1.msra.mxu0 0.0
        %1453 = vmatprep.subr.mxu0 0.0
        %1454 = vmatpush1.msra.mxu0 0.0
        %1455 = vmatprep.subr.mxu0 0.0
        %1456 = vmatpush1.msra.mxu0 0.0
        %1457 = vmatprep.mubr.f32.mxu0 0.0
        %1458 = vmatmul.mubr.f32.gmra.mrb[0].mxu0 %v1388
        %v1459 = vpop.f32.mrb[0].mxu0
        %v1460 = vadd.f32 0.0, %v1459
        %v1461 = vpop.f32.mrb[0].mxu0
        %v1462 = vadd.f32 0.0, %v1461
        %1463 = vmatprep.mubr.f32.mxu0 0.0
        %1464 = vmatmul.mubr.f32.gmra.mrb[0].mxu0 %v1391
        %v1465 = vpop.f32.mrb[0].mxu0
        %v1466 = vadd.f32 0.0, %v1465
        %v1467 = vpop.f32.mrb[0].mxu0
        %v1468 = vadd.f32 0.0, %v1467
        %1469 = vdwg.mxu0
        %v1470 = vadd.f32 %v1363, %v1460
        %v1471 = vadd.f32 %v1364, %v1462
        %v1472 = vadd.f32 %v1365, %v1466
        %v1473 = vadd.f32 %v1366, %v1468
        %1474 = vrot.lane.b32.xlu0 %v592, 111
        %v1475 = vpop.permute.xlu0 %1474
        %1476 = vrot.lane.b32.xlu0 %v593, 111
        %v1477 = vpop.permute.xlu0 %1476
        %1478 = vrot.lane.b32.xlu0 %v594, 111
        %v1479 = vpop.permute.xlu0 %1478
        %1480 = vrot.lane.b32.xlu0 %v595, 111
        %v1481 = vpop.permute.xlu0 %1480
        %vm1482 = vcmask 908288
        %v1483 = vsel %vm1482, %v1475, %v1477
        %v1484 = vsel %vm1482, %v1479, %v1481
        %v1489 = vsel %vm1482, %v1477, 0.0
        %v1490 = vsel %vm1482, %v1481, 0.0
        %v1491 = vmul.f32 %v1483, %v843
        %v1492 = vmul.f32 %v1489, %v847
        %v1493 = vmul.f32 %v1484, %v843
        %v1494 = vmul.f32 %v1490, %v847
        %s1495 = scalar_lea.vmem %s4, 128
        %v1496 = vld [vmem:[%s1495] sm:$0xff]
        %v1497 = vld [vmem:[%s1495 + $0x8] sm:$0xff]
        %v1499 = vsel %vm644, %v1496, 0
        %v1502 = vsel %vm644, %v1497, 0
        %1504 = vmatprep.subr.mxu0 %v1492
        %1505 = vmatpush1.msra.mxu0 %v1491
        %1506 = vmatprep.subr.mxu0 %v1494
        %1507 = vmatpush1.msra.mxu0 %v1493
        %1508 = vmatprep.subr.mxu0 0.0
        %1509 = vmatpush1.msra.mxu0 0.0
        %1510 = vmatprep.subr.mxu0 0.0
        %1511 = vmatpush1.msra.mxu0 0.0
        %1512 = vmatprep.subr.mxu0 0.0
        %1513 = vmatpush1.msra.mxu0 0.0
        %1514 = vmatprep.subr.mxu0 0.0
        %1515 = vmatpush1.msra.mxu0 0.0
        %1516 = vmatprep.subr.mxu0 0.0
        %1517 = vmatpush1.msra.mxu0 0.0
        %1518 = vmatprep.subr.mxu0 0.0
        %1519 = vmatpush1.msra.mxu0 0.0
        %1520 = vmatprep.subr.mxu0 0.0
        %1521 = vmatpush1.msra.mxu0 0.0
        %1522 = vmatprep.subr.mxu0 0.0
        %1523 = vmatpush1.msra.mxu0 0.0
        %1524 = vmatprep.subr.mxu0 0.0
        %1525 = vmatpush1.msra.mxu0 0.0
        %1526 = vmatprep.subr.mxu0 0.0
        %1527 = vmatpush1.msra.mxu0 0.0
        %1528 = vmatprep.subr.mxu0 0.0
        %1529 = vmatpush1.msra.mxu0 0.0
        %1530 = vmatprep.subr.mxu0 0.0
        %1531 = vmatpush1.msra.mxu0 0.0
        %1532 = vmatprep.subr.mxu0 0.0
        %1533 = vmatpush1.msra.mxu0 0.0
        %1534 = vmatprep.subr.mxu0 0.0
        %1535 = vmatpush1.msra.mxu0 0.0
        %1536 = vmatprep.subr.mxu0 0.0
        %1537 = vmatpush1.msra.mxu0 0.0
        %1538 = vmatprep.subr.mxu0 0.0
        %1539 = vmatpush1.msra.mxu0 0.0
        %1540 = vmatprep.subr.mxu0 0.0
        %1541 = vmatpush1.msra.mxu0 0.0
        %1542 = vmatprep.subr.mxu0 0.0
        %1543 = vmatpush1.msra.mxu0 0.0
        %1544 = vmatprep.subr.mxu0 0.0
        %1545 = vmatpush1.msra.mxu0 0.0
        %1546 = vmatprep.subr.mxu0 0.0
        %1547 = vmatpush1.msra.mxu0 0.0
        %1548 = vmatprep.subr.mxu0 0.0
        %1549 = vmatpush1.msra.mxu0 0.0
        %1550 = vmatprep.subr.mxu0 0.0
        %1551 = vmatpush1.msra.mxu0 0.0
        %1552 = vmatprep.subr.mxu0 0.0
        %1553 = vmatpush1.msra.mxu0 0.0
        %1554 = vmatprep.subr.mxu0 0.0
        %1555 = vmatpush1.msra.mxu0 0.0
        %1556 = vmatprep.subr.mxu0 0.0
        %1557 = vmatpush1.msra.mxu0 0.0
        %1558 = vmatprep.subr.mxu0 0.0
        %1559 = vmatpush1.msra.mxu0 0.0
        %1560 = vmatprep.subr.mxu0 0.0
        %1561 = vmatpush1.msra.mxu0 0.0
        %1562 = vmatprep.subr.mxu0 0.0
        %1563 = vmatpush1.msra.mxu0 0.0
        %1564 = vmatprep.subr.mxu0 0.0
        %1565 = vmatpush1.msra.mxu0 0.0
        %1566 = vmatprep.subr.mxu0 0.0
        %1567 = vmatpush1.msra.mxu0 0.0
        %1568 = vmatprep.mubr.f32.mxu0 0.0
        %1569 = vmatmul.mubr.f32.gmra.mrb[0].mxu0 %v1499
        %v1570 = vpop.f32.mrb[0].mxu0
        %v1571 = vadd.f32 0.0, %v1570
        %v1572 = vpop.f32.mrb[0].mxu0
        %v1573 = vadd.f32 0.0, %v1572
        %1574 = vmatprep.mubr.f32.mxu0 0.0
        %1575 = vmatmul.mubr.f32.gmra.mrb[0].mxu0 %v1502
        %v1576 = vpop.f32.mrb[0].mxu0
        %v1577 = vadd.f32 0.0, %v1576
        %v1578 = vpop.f32.mrb[0].mxu0
        %v1579 = vadd.f32 0.0, %v1578
        %1580 = vdwg.mxu0
        %v1581 = vadd.f32 %v1470, %v1571
        %v1582 = vadd.f32 %v1471, %v1573
        %v1583 = vadd.f32 %v1472, %v1577
        %v1584 = vadd.f32 %v1473, %v1579
        %v1585 = vld [vmem:[%s5] sm:$0xff]
        %v1586 = vld [vmem:[%s5 + $0x8] sm:$0xff]
        %1588 = vset.pattern.permute.xlu0 0
        %1589 = vperm.xlu0 %1588, %v1585
        %v1590 = vpop.permute.xlu0 %1589
        %1593 = vset.pattern.permute.xlu0 0
        %1594 = vperm.xlu0 %1593, %v1586
        %v1595 = vpop.permute.xlu0 %1594
        %v1597 = vmul.f32 %v1581, %v1590
        %v1598 = vmul.f32 %v1582, %v1590
        %v1599 = vmul.f32 %v1583, %v1595
        %v1600 = vmul.f32 %v1584, %v1595
        %v1601 = vld [vmem:[%s6] sm:$0xff]
        %v1602 = vld [vmem:[%s6 + $0x8] sm:$0xff]
        %1604 = vset.pattern.permute.xlu0 0
        %1605 = vperm.xlu0 %1604, %v1601
        %v1606 = vpop.permute.xlu0 %1605
        %1609 = vset.pattern.permute.xlu0 0
        %1610 = vperm.xlu0 %1609, %v1602
        %v1611 = vpop.permute.xlu0 %1610
        %v1613 = vadd.f32 %v1597, %v1606
        %v1614 = vadd.f32 %v1598, %v1606
        %v1615 = vadd.f32 %v1599, %v1611
        %v1616 = vadd.f32 %v1600, %v1611
        %v1617 = vmax.f32 %v1613, 0.0
        %v1618 = vmax.f32 %v1614, 0.0
        %v1619 = vmax.f32 %v1615, 0.0
        %v1620 = vmax.f32 %v1616, 0.0
        %v1621 = vld [vmem:[%s7] sm:$0xff]
        %v1622 = vld [vmem:[%s7 + $0x8] sm:$0xff]
        %v1623 = vld [vmem:[%s7 + $0x10] sm:$0xff]
        %v1624 = vld [vmem:[%s7 + $0x18] sm:$0xff]
        %v1625 = vld [vmem:[%s7 + $0x20] sm:$0xff]
        %v1626 = vld [vmem:[%s7 + $0x28] sm:$0xff]
        %v1627 = vld [vmem:[%s7 + $0x30] sm:$0xff]
        %v1628 = vld [vmem:[%s7 + $0x38] sm:$0xff]
        %v1630 = vsel %vm644, %v1621, 0
        %v1633 = vsel %vm644, %v1622, 0
        %v1636 = vsel %vm644, %v1623, 0
        %v1639 = vsel %vm644, %v1624, 0
        %v1642 = vsel %vm644, %v1625, 0
        %v1645 = vsel %vm644, %v1626, 0
        %v1648 = vsel %vm644, %v1627, 0
        %v1651 = vsel %vm644, %v1628, 0
        %1653 = vmatprep.subr.mxu0 %v1618
        %1654 = vmatpush1.msra.mxu0 %v1617
        %1655 = vmatprep.subr.mxu0 %v1620
        %1656 = vmatpush1.msra.mxu0 %v1619
        %1657 = vmatprep.subr.mxu0 0.0
        %1658 = vmatpush1.msra.mxu0 0.0
        %1659 = vmatprep.subr.mxu0 0.0
        %1660 = vmatpush1.msra.mxu0 0.0
        %1661 = vmatprep.subr.mxu0 0.0
        %1662 = vmatpush1.msra.mxu0 0.0
        %1663 = vmatprep.subr.mxu0 0.0
        %1664 = vmatpush1.msra.mxu0 0.0
        %1665 = vmatprep.subr.mxu0 0.0
        %1666 = vmatpush1.msra.mxu0 0.0
        %1667 = vmatprep.subr.mxu0 0.0
        %1668 = vmatpush1.msra.mxu0 0.0
        %1669 = vmatprep.subr.mxu0 0.0
        %1670 = vmatpush1.msra.mxu0 0.0
        %1671 = vmatprep.subr.mxu0 0.0
        %1672 = vmatpush1.msra.mxu0 0.0
        %1673 = vmatprep.subr.mxu0 0.0
        %1674 = vmatpush1.msra.mxu0 0.0
        %1675 = vmatprep.subr.mxu0 0.0
        %1676 = vmatpush1.msra.mxu0 0.0
        %1677 = vmatprep.subr.mxu0 0.0
        %1678 = vmatpush1.msra.mxu0 0.0
        %1679 = vmatprep.subr.mxu0 0.0
        %1680 = vmatpush1.msra.mxu0 0.0
        %1681 = vmatprep.subr.mxu0 0.0
        %1682 = vmatpush1.msra.mxu0 0.0
        %1683 = vmatprep.subr.mxu0 0.0
        %1684 = vmatpush1.msra.mxu0 0.0
        %1685 = vmatprep.subr.mxu0 0.0
        %1686 = vmatpush1.msra.mxu0 0.0
        %1687 = vmatprep.subr.mxu0 0.0
        %1688 = vmatpush1.msra.mxu0 0.0
        %1689 = vmatprep.subr.mxu0 0.0
        %1690 = vmatpush1.msra.mxu0 0.0
        %1691 = vmatprep.subr.mxu0 0.0
        %1692 = vmatpush1.msra.mxu0 0.0
        %1693 = vmatprep.subr.mxu0 0.0
        %1694 = vmatpush1.msra.mxu0 0.0
        %1695 = vmatprep.subr.mxu0 0.0
        %1696 = vmatpush1.msra.mxu0 0.0
        %1697 = vmatprep.subr.mxu0 0.0
        %1698 = vmatpush1.msra.mxu0 0.0
        %1699 = vmatprep.subr.mxu0 0.0
        %1700 = vmatpush1.msra.mxu0 0.0
        %1701 = vmatprep.subr.mxu0 0.0
        %1702 = vmatpush1.msra.mxu0 0.0
        %1703 = vmatprep.subr.mxu0 0.0
        %1704 = vmatpush1.msra.mxu0 0.0
        %1705 = vmatprep.subr.mxu0 0.0
        %1706 = vmatpush1.msra.mxu0 0.0
        %1707 = vmatprep.subr.mxu0 0.0
        %1708 = vmatpush1.msra.mxu0 0.0
        %1709 = vmatprep.subr.mxu0 0.0
        %1710 = vmatpush1.msra.mxu0 0.0
        %1711 = vmatprep.subr.mxu0 0.0
        %1712 = vmatpush1.msra.mxu0 0.0
        %1713 = vmatprep.subr.mxu0 0.0
        %1714 = vmatpush1.msra.mxu0 0.0
        %1715 = vmatprep.subr.mxu0 0.0
        %1716 = vmatpush1.msra.mxu0 0.0
        %1717 = vmatprep.mubr.f32.mxu0 0.0
        %1718 = vmatmul.mubr.f32.gmra.mrb[0].mxu0 %v1630
        %v1719 = vpop.f32.mrb[0].mxu0
        %v1720 = vadd.f32 0.0, %v1719
        %v1721 = vpop.f32.mrb[0].mxu0
        %v1722 = vadd.f32 0.0, %v1721
        %1723 = vmatprep.mubr.f32.mxu0 0.0
        %1724 = vmatmul.mubr.f32.gmra.mrb[0].mxu0 %v1633
        %v1725 = vpop.f32.mrb[0].mxu0
        %v1726 = vadd.f32 0.0, %v1725
        %v1727 = vpop.f32.mrb[0].mxu0
        %v1728 = vadd.f32 0.0, %v1727
        %1729 = vmatprep.mubr.f32.mxu0 0.0
        %1730 = vmatmul.mubr.f32.gmra.mrb[0].mxu0 %v1636
        %v1731 = vpop.f32.mrb[0].mxu0
        %v1732 = vadd.f32 0.0, %v1731
        %v1733 = vpop.f32.mrb[0].mxu0
        %v1734 = vadd.f32 0.0, %v1733
        %1735 = vmatprep.mubr.f32.mxu0 0.0
        %1736 = vmatmul.mubr.f32.gmra.mrb[0].mxu0 %v1639
        %v1737 = vpop.f32.mrb[0].mxu0
        %v1738 = vadd.f32 0.0, %v1737
        %v1739 = vpop.f32.mrb[0].mxu0
        %v1740 = vadd.f32 0.0, %v1739
        %1741 = vmatprep.mubr.f32.mxu0 0.0
        %1742 = vmatmul.mubr.f32.gmra.mrb[0].mxu0 %v1642
        %v1743 = vpop.f32.mrb[0].mxu0
        %v1744 = vadd.f32 0.0, %v1743
        %v1745 = vpop.f32.mrb[0].mxu0
        %v1746 = vadd.f32 0.0, %v1745
        %1747 = vmatprep.mubr.f32.mxu0 0.0
        %1748 = vmatmul.mubr.f32.gmra.mrb[0].mxu0 %v1645
        %v1749 = vpop.f32.mrb[0].mxu0
        %v1750 = vadd.f32 0.0, %v1749
        %v1751 = vpop.f32.mrb[0].mxu0
        %v1752 = vadd.f32 0.0, %v1751
        %1753 = vmatprep.mubr.f32.mxu0 0.0
        %1754 = vmatmul.mubr.f32.gmra.mrb[0].mxu0 %v1648
        %v1755 = vpop.f32.mrb[0].mxu0
        %v1756 = vadd.f32 0.0, %v1755
        %v1757 = vpop.f32.mrb[0].mxu0
        %v1758 = vadd.f32 0.0, %v1757
        %1759 = vmatprep.mubr.f32.mxu0 0.0
        %1760 = vmatmul.mubr.f32.gmra.mrb[0].mxu0 %v1651
        %v1761 = vpop.f32.mrb[0].mxu0
        %v1762 = vadd.f32 0.0, %v1761
        %v1763 = vpop.f32.mrb[0].mxu0
        %v1764 = vadd.f32 0.0, %v1763
        %1765 = vdwg.mxu0
        %v1766 = vld [vmem:[%s8] sm:$0xff]
        %v1767 = vld [vmem:[%s8 + $0x8] sm:$0xff]
        %v1768 = vld [vmem:[%s8 + $0x10] sm:$0xff]
        %v1769 = vld [vmem:[%s8 + $0x18] sm:$0xff]
        %v1770 = vld [vmem:[%s8 + $0x20] sm:$0xff]
        %v1771 = vld [vmem:[%s8 + $0x28] sm:$0xff]
        %v1772 = vld [vmem:[%s8 + $0x30] sm:$0xff]
        %v1773 = vld [vmem:[%s8 + $0x38] sm:$0xff]
        %1775 = vset.pattern.permute.xlu0 0
        %1776 = vperm.xlu0 %1775, %v1766
        %v1777 = vpop.permute.xlu0 %1776
        %1780 = vset.pattern.permute.xlu0 0
        %1781 = vperm.xlu0 %1780, %v1767
        %v1782 = vpop.permute.xlu0 %1781
        %1785 = vset.pattern.permute.xlu0 0
        %1786 = vperm.xlu0 %1785, %v1768
        %v1787 = vpop.permute.xlu0 %1786
        %1790 = vset.pattern.permute.xlu0 0
        %1791 = vperm.xlu0 %1790, %v1769
        %v1792 = vpop.permute.xlu0 %1791
        %1795 = vset.pattern.permute.xlu0 0
        %1796 = vperm.xlu0 %1795, %v1770
        %v1797 = vpop.permute.xlu0 %1796
        %1800 = vset.pattern.permute.xlu0 0
        %1801 = vperm.xlu0 %1800, %v1771
        %v1802 = vpop.permute.xlu0 %1801
        %1805 = vset.pattern.permute.xlu0 0
        %1806 = vperm.xlu0 %1805, %v1772
        %v1807 = vpop.permute.xlu0 %1806
        %1810 = vset.pattern.permute.xlu0 0
        %1811 = vperm.xlu0 %1810, %v1773
        %v1812 = vpop.permute.xlu0 %1811
        %v1814 = vmul.f32 %v1720, %v1777
        %v1815 = vmul.f32 %v1722, %v1777
        %v1816 = vmul.f32 %v1726, %v1782
        %v1817 = vmul.f32 %v1728, %v1782
        %v1818 = vmul.f32 %v1732, %v1787
        %v1819 = vmul.f32 %v1734, %v1787
        %v1820 = vmul.f32 %v1738, %v1792
        %v1821 = vmul.f32 %v1740, %v1792
        %v1822 = vmul.f32 %v1744, %v1797
        %v1823 = vmul.f32 %v1746, %v1797
        %v1824 = vmul.f32 %v1750, %v1802
        %v1825 = vmul.f32 %v1752, %v1802
        %v1826 = vmul.f32 %v1756, %v1807
        %v1827 = vmul.f32 %v1758, %v1807
        %v1828 = vmul.f32 %v1762, %v1812
        %v1829 = vmul.f32 %v1764, %v1812
        %v1830 = vld [vmem:[%s9] sm:$0xff]
        %v1831 = vld [vmem:[%s9 + $0x8] sm:$0xff]
        %v1832 = vld [vmem:[%s9 + $0x10] sm:$0xff]
        %v1833 = vld [vmem:[%s9 + $0x18] sm:$0xff]
        %v1834 = vld [vmem:[%s9 + $0x20] sm:$0xff]
        %v1835 = vld [vmem:[%s9 + $0x28] sm:$0xff]
        %v1836 = vld [vmem:[%s9 + $0x30] sm:$0xff]
        %v1837 = vld [vmem:[%s9 + $0x38] sm:$0xff]
        %1839 = vset.pattern.permute.xlu0 0
        %1840 = vperm.xlu0 %1839, %v1830
        %v1841 = vpop.permute.xlu0 %1840
        %1844 = vset.pattern.permute.xlu0 0
        %1845 = vperm.xlu0 %1844, %v1831
        %v1846 = vpop.permute.xlu0 %1845
        %1849 = vset.pattern.permute.xlu0 0
        %1850 = vperm.xlu0 %1849, %v1832
        %v1851 = vpop.permute.xlu0 %1850
        %1854 = vset.pattern.permute.xlu0 0
        %1855 = vperm.xlu0 %1854, %v1833
        %v1856 = vpop.permute.xlu0 %1855
        %1859 = vset.pattern.permute.xlu0 0
        %1860 = vperm.xlu0 %1859, %v1834
        %v1861 = vpop.permute.xlu0 %1860
        %1864 = vset.pattern.permute.xlu0 0
        %1865 = vperm.xlu0 %1864, %v1835
        %v1866 = vpop.permute.xlu0 %1865
        %1869 = vset.pattern.permute.xlu0 0
        %1870 = vperm.xlu0 %1869, %v1836
        %v1871 = vpop.permute.xlu0 %1870
        %1874 = vset.pattern.permute.xlu0 0
        %1875 = vperm.xlu0 %1874, %v1837
        %v1876 = vpop.permute.xlu0 %1875
        %v1878 = vadd.f32 %v1814, %v1841
        %v1879 = vadd.f32 %v1815, %v1841
        %v1880 = vadd.f32 %v1816, %v1846
        %v1881 = vadd.f32 %v1817, %v1846
        %v1882 = vadd.f32 %v1818, %v1851
        %v1883 = vadd.f32 %v1819, %v1851
        %v1884 = vadd.f32 %v1820, %v1856
        %v1885 = vadd.f32 %v1821, %v1856
        %v1886 = vadd.f32 %v1822, %v1861
        %v1887 = vadd.f32 %v1823, %v1861
        %v1888 = vadd.f32 %v1824, %v1866
        %v1889 = vadd.f32 %v1825, %v1866
        %v1890 = vadd.f32 %v1826, %v1871
        %v1891 = vadd.f32 %v1827, %v1871
        %v1892 = vadd.f32 %v1828, %v1876
        %v1893 = vadd.f32 %v1829, %v1876
        %v1894 = vadd.f32 %v1878, %v1879
        %1895 = vadd.xlane.f32.xlu0 %v1894
        %v1896 = vpop.xlane.xlu0 %1895
        %v1897 = vadd.f32 %v1880, %v1881
        %1898 = vadd.xlane.f32.xlu0 %v1897
        %v1899 = vpop.xlane.xlu0 %1898
        %v1900 = vadd.f32 %v1882, %v1883
        %1901 = vadd.xlane.f32.xlu0 %v1900
        %v1902 = vpop.xlane.xlu0 %1901
        %v1903 = vadd.f32 %v1884, %v1885
        %1904 = vadd.xlane.f32.xlu0 %v1903
        %v1905 = vpop.xlane.xlu0 %1904
        %v1906 = vadd.f32 %v1886, %v1887
        %1907 = vadd.xlane.f32.xlu0 %v1906
        %v1908 = vpop.xlane.xlu0 %1907
        %v1909 = vadd.f32 %v1888, %v1889
        %1910 = vadd.xlane.f32.xlu0 %v1909
        %v1911 = vpop.xlane.xlu0 %1910
        %v1912 = vadd.f32 %v1890, %v1891
        %1913 = vadd.xlane.f32.xlu0 %v1912
        %v1914 = vpop.xlane.xlu0 %1913
        %v1915 = vadd.f32 %v1892, %v1893
        %1916 = vadd.xlane.f32.xlu0 %v1915
        %v1917 = vpop.xlane.xlu0 %1916
        %v1918 = vmul.f32 %v1896, 0.00390625
        %v1919 = vmul.f32 %v1899, 0.00390625
        %v1920 = vmul.f32 %v1902, 0.00390625
        %v1921 = vmul.f32 %v1905, 0.00390625
        %v1922 = vmul.f32 %v1908, 0.00390625
        %v1923 = vmul.f32 %v1911, 0.00390625
        %v1924 = vmul.f32 %v1914, 0.00390625
        %v1925 = vmul.f32 %v1917, 0.00390625
        %v1926 = vld [vmem:[%s10] sm:$0xff]
        %v1927 = vld [vmem:[%s10 + $0x8] sm:$0xff]
        %vm1928 = vcmask 523264
        %v1930 = vsel %vm1928, %v1926, 0
        %v1933 = vsel %vm1928, %v1927, 0
        %1935 = vmatprep.subr.mxu0 0.0
        %1936 = vmatpush1.msra.mxu0 %v1918
        %1937 = vmatprep.subr.mxu0 0.0
        %1938 = vmatpush1.msra.mxu0 %v1919
        %1939 = vmatprep.subr.mxu0 0.0
        %1940 = vmatpush1.msra.mxu0 %v1920
        %1941 = vmatprep.subr.mxu0 0.0
        %1942 = vmatpush1.msra.mxu0 %v1921
        %1943 = vmatprep.subr.mxu0 0.0
        %1944 = vmatpush1.msra.mxu0 %v1922
        %1945 = vmatprep.subr.mxu0 0.0
        %1946 = vmatpush1.msra.mxu0 %v1923
        %1947 = vmatprep.subr.mxu0 0.0
        %1948 = vmatpush1.msra.mxu0 %v1924
        %1949 = vmatprep.subr.mxu0 0.0
        %1950 = vmatpush1.msra.mxu0 %v1925
        %1951 = vmatprep.subr.mxu0 0.0
        %1952 = vmatpush1.msra.mxu0 0.0
        %1953 = vmatprep.subr.mxu0 0.0
        %1954 = vmatpush1.msra.mxu0 0.0
        %1955 = vmatprep.subr.mxu0 0.0
        %1956 = vmatpush1.msra.mxu0 0.0
        %1957 = vmatprep.subr.mxu0 0.0
        %1958 = vmatpush1.msra.mxu0 0.0
        %1959 = vmatprep.subr.mxu0 0.0
        %1960 = vmatpush1.msra.mxu0 0.0
        %1961 = vmatprep.subr.mxu0 0.0
        %1962 = vmatpush1.msra.mxu0 0.0
        %1963 = vmatprep.subr.mxu0 0.0
        %1964 = vmatpush1.msra.mxu0 0.0
        %1965 = vmatprep.subr.mxu0 0.0
        %1966 = vmatpush1.msra.mxu0 0.0
        %1967 = vmatprep.subr.mxu0 0.0
        %1968 = vmatpush1.msra.mxu0 0.0
        %1969 = vmatprep.subr.mxu0 0.0
        %1970 = vmatpush1.msra.mxu0 0.0
        %1971 = vmatprep.subr.mxu0 0.0
        %1972 = vmatpush1.msra.mxu0 0.0
        %1973 = vmatprep.subr.mxu0 0.0
        %1974 = vmatpush1.msra.mxu0 0.0
        %1975 = vmatprep.subr.mxu0 0.0
        %1976 = vmatpush1.msra.mxu0 0.0
        %1977 = vmatprep.subr.mxu0 0.0
        %1978 = vmatpush1.msra.mxu0 0.0
        %1979 = vmatprep.subr.mxu0 0.0
        %1980 = vmatpush1.msra.mxu0 0.0
        %1981 = vmatprep.subr.mxu0 0.0
        %1982 = vmatpush1.msra.mxu0 0.0
        %1983 = vmatprep.subr.mxu0 0.0
        %1984 = vmatpush1.msra.mxu0 0.0
        %1985 = vmatprep.subr.mxu0 0.0
        %1986 = vmatpush1.msra.mxu0 0.0
        %1987 = vmatprep.subr.mxu0 0.0
        %1988 = vmatpush1.msra.mxu0 0.0
        %1989 = vmatprep.subr.mxu0 0.0
        %1990 = vmatpush1.msra.mxu0 0.0
        %1991 = vmatprep.subr.mxu0 0.0
        %1992 = vmatpush1.msra.mxu0 0.0
        %1993 = vmatprep.subr.mxu0 0.0
        %1994 = vmatpush1.msra.mxu0 0.0
        %1995 = vmatprep.subr.mxu0 0.0
        %1996 = vmatpush1.msra.mxu0 0.0
        %1997 = vmatprep.subr.mxu0 0.0
        %1998 = vmatpush1.msra.mxu0 0.0
        %1999 = vmatprep.mubr.f32.mxu0 0.0
        %2000 = vmatmul.mubr.f32.gmra.mrb[0].mxu0 %v1930
        %v2001 = vpop.f32.mrb[0].mxu0
        %v2002 = vadd.f32 0.0, %v2001
        %v2003 = vpop.f32.mrb[0].mxu0
        %2004 = vmatprep.mubr.f32.mxu0 0.0
        %2005 = vmatmul.mubr.f32.gmra.mrb[0].mxu0 %v1933
        %v2006 = vpop.f32.mrb[0].mxu0
        %v2007 = vadd.f32 0.0, %v2006
        %v2008 = vpop.f32.mrb[0].mxu0
        %2009 = vdwg.mxu0
        %v2010 = vmax.f32 %v2002, 0.0
        %v2011 = vmax.f32 %v2007, 0.0
        %v2012 = vld [vmem:[%s11] sm:$0xff]
        %v2013 = vld [vmem:[%s11 + $0x8] sm:$0xff]
        %v2014 = vld [vmem:[%s11 + $0x10] sm:$0xff]
        %v2015 = vld [vmem:[%s11 + $0x18] sm:$0xff]
        %v2016 = vld [vmem:[%s11 + $0x20] sm:$0xff]
        %v2017 = vld [vmem:[%s11 + $0x28] sm:$0xff]
        %v2018 = vld [vmem:[%s11 + $0x30] sm:$0xff]
        %v2019 = vld [vmem:[%s11 + $0x38] sm:$0xff]
        %v2021 = vsel %vm644, %v2012, 0
        %v2024 = vsel %vm644, %v2013, 0
        %v2027 = vsel %vm644, %v2014, 0
        %v2030 = vsel %vm644, %v2015, 0
        %v2033 = vsel %vm644, %v2016, 0
        %v2036 = vsel %vm644, %v2017, 0
        %v2039 = vsel %vm644, %v2018, 0
        %v2042 = vsel %vm644, %v2019, 0
        %2044 = vmatprep.subr.mxu0 0.0
        %2045 = vmatpush1.msra.mxu0 %v2010
        %2046 = vmatprep.subr.mxu0 0.0
        %2047 = vmatpush1.msra.mxu0 %v2011
        %2048 = vmatprep.subr.mxu0 0.0
        %2049 = vmatpush1.msra.mxu0 0.0
        %2050 = vmatprep.subr.mxu0 0.0
        %2051 = vmatpush1.msra.mxu0 0.0
        %2052 = vmatprep.subr.mxu0 0.0
        %2053 = vmatpush1.msra.mxu0 0.0
        %2054 = vmatprep.subr.mxu0 0.0
        %2055 = vmatpush1.msra.mxu0 0.0
        %2056 = vmatprep.subr.mxu0 0.0
        %2057 = vmatpush1.msra.mxu0 0.0
        %2058 = vmatprep.subr.mxu0 0.0
        %2059 = vmatpush1.msra.mxu0 0.0
        %2060 = vmatprep.subr.mxu0 0.0
        %2061 = vmatpush1.msra.mxu0 0.0
        %2062 = vmatprep.subr.mxu0 0.0
        %2063 = vmatpush1.msra.mxu0 0.0
        %2064 = vmatprep.subr.mxu0 0.0
        %2065 = vmatpush1.msra.mxu0 0.0
        %2066 = vmatprep.subr.mxu0 0.0
        %2067 = vmatpush1.msra.mxu0 0.0
        %2068 = vmatprep.subr.mxu0 0.0
        %2069 = vmatpush1.msra.mxu0 0.0
        %2070 = vmatprep.subr.mxu0 0.0
        %2071 = vmatpush1.msra.mxu0 0.0
        %2072 = vmatprep.subr.mxu0 0.0
        %2073 = vmatpush1.msra.mxu0 0.0
        %2074 = vmatprep.subr.mxu0 0.0
        %2075 = vmatpush1.msra.mxu0 0.0
        %2076 = vmatprep.subr.mxu0 0.0
        %2077 = vmatpush1.msra.mxu0 0.0
        %2078 = vmatprep.subr.mxu0 0.0
        %2079 = vmatpush1.msra.mxu0 0.0
        %2080 = vmatprep.subr.mxu0 0.0
        %2081 = vmatpush1.msra.mxu0 0.0
        %2082 = vmatprep.subr.mxu0 0.0
        %2083 = vmatpush1.msra.mxu0 0.0
        %2084 = vmatprep.subr.mxu0 0.0
        %2085 = vmatpush1.msra.mxu0 0.0
        %2086 = vmatprep.subr.mxu0 0.0
        %2087 = vmatpush1.msra.mxu0 0.0
        %2088 = vmatprep.subr.mxu0 0.0
        %2089 = vmatpush1.msra.mxu0 0.0
        %2090 = vmatprep.subr.mxu0 0.0
        %2091 = vmatpush1.msra.mxu0 0.0
        %2092 = vmatprep.subr.mxu0 0.0
        %2093 = vmatpush1.msra.mxu0 0.0
        %2094 = vmatprep.subr.mxu0 0.0
        %2095 = vmatpush1.msra.mxu0 0.0
        %2096 = vmatprep.subr.mxu0 0.0
        %2097 = vmatpush1.msra.mxu0 0.0
        %2098 = vmatprep.subr.mxu0 0.0
        %2099 = vmatpush1.msra.mxu0 0.0
        %2100 = vmatprep.subr.mxu0 0.0
        %2101 = vmatpush1.msra.mxu0 0.0
        %2102 = vmatprep.subr.mxu0 0.0
        %2103 = vmatpush1.msra.mxu0 0.0
        %2104 = vmatprep.subr.mxu0 0.0
        %2105 = vmatpush1.msra.mxu0 0.0
        %2106 = vmatprep.subr.mxu0 0.0
        %2107 = vmatpush1.msra.mxu0 0.0
        %2108 = vmatprep.mubr.f32.mxu0 0.0
        %2109 = vmatmul.mubr.f32.gmra.mrb[0].mxu0 %v2021
        %v2110 = vpop.f32.mrb[0].mxu0
        %v2111 = vadd.f32 0.0, %v2110
        %v2112 = vpop.f32.mrb[0].mxu0
        %2113 = vmatprep.mubr.f32.mxu0 0.0
        %2114 = vmatmul.mubr.f32.gmra.mrb[0].mxu0 %v2024
        %v2115 = vpop.f32.mrb[0].mxu0
        %v2116 = vadd.f32 0.0, %v2115
        %v2117 = vpop.f32.mrb[0].mxu0
        %2118 = vmatprep.mubr.f32.mxu0 0.0
        %2119 = vmatmul.mubr.f32.gmra.mrb[0].mxu0 %v2027
        %v2120 = vpop.f32.mrb[0].mxu0
        %v2121 = vadd.f32 0.0, %v2120
        %v2122 = vpop.f32.mrb[0].mxu0
        %2123 = vmatprep.mubr.f32.mxu0 0.0
        %2124 = vmatmul.mubr.f32.gmra.mrb[0].mxu0 %v2030
        %v2125 = vpop.f32.mrb[0].mxu0
        %v2126 = vadd.f32 0.0, %v2125
        %v2127 = vpop.f32.mrb[0].mxu0
        %2128 = vmatprep.mubr.f32.mxu0 0.0
        %2129 = vmatmul.mubr.f32.gmra.mrb[0].mxu0 %v2033
        %v2130 = vpop.f32.mrb[0].mxu0
        %v2131 = vadd.f32 0.0, %v2130
        %v2132 = vpop.f32.mrb[0].mxu0
        %2133 = vmatprep.mubr.f32.mxu0 0.0
        %2134 = vmatmul.mubr.f32.gmra.mrb[0].mxu0 %v2036
        %v2135 = vpop.f32.mrb[0].mxu0
        %v2136 = vadd.f32 0.0, %v2135
        %v2137 = vpop.f32.mrb[0].mxu0
        %2138 = vmatprep.mubr.f32.mxu0 0.0
        %2139 = vmatmul.mubr.f32.gmra.mrb[0].mxu0 %v2039
        %v2140 = vpop.f32.mrb[0].mxu0
        %v2141 = vadd.f32 0.0, %v2140
        %v2142 = vpop.f32.mrb[0].mxu0
        %2143 = vmatprep.mubr.f32.mxu0 0.0
        %2144 = vmatmul.mubr.f32.gmra.mrb[0].mxu0 %v2042
        %v2145 = vpop.f32.mrb[0].mxu0
        %v2146 = vadd.f32 0.0, %v2145
        %v2147 = vpop.f32.mrb[0].mxu0
        %2148 = vdwg.mxu0
        %v2149 = vxor.u32 %v2111, 2147483648
        %v2150 = vxor.u32 %v2116, 2147483648
        %v2151 = vxor.u32 %v2121, 2147483648
        %v2152 = vxor.u32 %v2126, 2147483648
        %v2153 = vxor.u32 %v2131, 2147483648
        %v2154 = vxor.u32 %v2136, 2147483648
        %v2155 = vxor.u32 %v2141, 2147483648
        %v2156 = vxor.u32 %v2146, 2147483648
        %v2157 = vmul.f32 %v2149, 1.442695
        %v2158 = vpow.pop %v2157
        %v2159 = vmul.f32 %v2150, 1.442695
        %v2160 = vpow.pop %v2159
        %v2161 = vmul.f32 %v2151, 1.442695
        %v2162 = vpow.pop %v2161
        %v2163 = vmul.f32 %v2152, 1.442695
        %v2164 = vpow.pop %v2163
        %v2165 = vmul.f32 %v2153, 1.442695
        %v2166 = vpow.pop %v2165
        %v2167 = vmul.f32 %v2154, 1.442695
        %v2168 = vpow.pop %v2167
        %v2169 = vmul.f32 %v2155, 1.442695
        %v2170 = vpow.pop %v2169
        %v2171 = vmul.f32 %v2156, 1.442695
        %v2172 = vpow.pop %v2171
        %v2173 = vadd.f32 %v2158, 1.0
        %v2174 = vadd.f32 %v2160, 1.0
        %v2175 = vadd.f32 %v2162, 1.0
        %v2176 = vadd.f32 %v2164, 1.0
        %v2177 = vadd.f32 %v2166, 1.0
        %v2178 = vadd.f32 %v2168, 1.0
        %v2179 = vadd.f32 %v2170, 1.0
        %v2180 = vadd.f32 %v2172, 1.0
        %v2181 = vrcp.pop %v2173
        %v2182 = vmul.f32 1.0, %v2181
        %v2183 = vrcp.pop %v2174
        %v2184 = vmul.f32 1.0, %v2183
        %v2185 = vrcp.pop %v2175
        %v2186 = vmul.f32 1.0, %v2185
        %v2187 = vrcp.pop %v2176
        %v2188 = vmul.f32 1.0, %v2187
        %v2189 = vrcp.pop %v2177
        %v2190 = vmul.f32 1.0, %v2189
        %v2191 = vrcp.pop %v2178
        %v2192 = vmul.f32 1.0, %v2191
        %v2193 = vrcp.pop %v2179
        %v2194 = vmul.f32 1.0, %v2193
        %v2195 = vrcp.pop %v2180
        %v2196 = vmul.f32 1.0, %v2195
        %2198 = vset.pattern.permute.xlu0 0
        %2199 = vperm.xlu0 %2198, %v2182
        %v2200 = vpop.permute.xlu0 %2199
        %2203 = vset.pattern.permute.xlu0 0
        %2204 = vperm.xlu0 %2203, %v2184
        %v2205 = vpop.permute.xlu0 %2204
        %2208 = vset.pattern.permute.xlu0 0
        %2209 = vperm.xlu0 %2208, %v2186
        %v2210 = vpop.permute.xlu0 %2209
        %2213 = vset.pattern.permute.xlu0 0
        %2214 = vperm.xlu0 %2213, %v2188
        %v2215 = vpop.permute.xlu0 %2214
        %2218 = vset.pattern.permute.xlu0 0
        %2219 = vperm.xlu0 %2218, %v2190
        %v2220 = vpop.permute.xlu0 %2219
        %2223 = vset.pattern.permute.xlu0 0
        %2224 = vperm.xlu0 %2223, %v2192
        %v2225 = vpop.permute.xlu0 %2224
        %2228 = vset.pattern.permute.xlu0 0
        %2229 = vperm.xlu0 %2228, %v2194
        %v2230 = vpop.permute.xlu0 %2229
        %2233 = vset.pattern.permute.xlu0 0
        %2234 = vperm.xlu0 %2233, %v2196
        %v2235 = vpop.permute.xlu0 %2234
        %v2237 = vmul.f32 %v1878, %v2200
        %v2238 = vmul.f32 %v1879, %v2200
        %v2239 = vmul.f32 %v1880, %v2205
        %v2240 = vmul.f32 %v1881, %v2205
        %v2241 = vmul.f32 %v1882, %v2210
        %v2242 = vmul.f32 %v1883, %v2210
        %v2243 = vmul.f32 %v1884, %v2215
        %v2244 = vmul.f32 %v1885, %v2215
        %v2245 = vmul.f32 %v1886, %v2220
        %v2246 = vmul.f32 %v1887, %v2220
        %v2247 = vmul.f32 %v1888, %v2225
        %v2248 = vmul.f32 %v1889, %v2225
        %v2249 = vmul.f32 %v1890, %v2230
        %v2250 = vmul.f32 %v1891, %v2230
        %v2251 = vmul.f32 %v1892, %v2235
        %v2252 = vmul.f32 %v1893, %v2235
        %v2253 = vmax.f32 %v2237, 0.0
        %v2254 = vmax.f32 %v2238, 0.0
        %v2255 = vmax.f32 %v2239, 0.0
        %v2256 = vmax.f32 %v2240, 0.0
        %v2257 = vmax.f32 %v2241, 0.0
        %v2258 = vmax.f32 %v2242, 0.0
        %v2259 = vmax.f32 %v2243, 0.0
        %v2260 = vmax.f32 %v2244, 0.0
        %v2261 = vmax.f32 %v2245, 0.0
        %v2262 = vmax.f32 %v2246, 0.0
        %v2263 = vmax.f32 %v2247, 0.0
        %v2264 = vmax.f32 %v2248, 0.0
        %v2265 = vmax.f32 %v2249, 0.0
        %v2266 = vmax.f32 %v2250, 0.0
        %v2267 = vmax.f32 %v2251, 0.0
        %v2268 = vmax.f32 %v2252, 0.0
        %2269 = vst [vmem:[%s460] sm:$0xff] %v2253
        %2270 = vst [vmem:[%s460 + $0x8] sm:$0xff] %v2254
        %2271 = vst [vmem:[%s460 + $0x10] sm:$0xff] %v2255
        %2272 = vst [vmem:[%s460 + $0x18] sm:$0xff] %v2256
        %2273 = vst [vmem:[%s460 + $0x20] sm:$0xff] %v2257
        %2274 = vst [vmem:[%s460 + $0x28] sm:$0xff] %v2258
        %2275 = vst [vmem:[%s460 + $0x30] sm:$0xff] %v2259
        %2276 = vst [vmem:[%s460 + $0x38] sm:$0xff] %v2260
        %2277 = vst [vmem:[%s460 + $0x40] sm:$0xff] %v2261
        %2278 = vst [vmem:[%s460 + $0x48] sm:$0xff] %v2262
        %2279 = vst [vmem:[%s460 + $0x50] sm:$0xff] %v2263
        %2280 = vst [vmem:[%s460 + $0x58] sm:$0xff] %v2264
        %2281 = vst [vmem:[%s460 + $0x60] sm:$0xff] %v2265
        %2282 = vst [vmem:[%s460 + $0x68] sm:$0xff] %v2266
        %2283 = vst [vmem:[%s460 + $0x70] sm:$0xff] %v2267
        %2284 = vst [vmem:[%s460 + $0x78] sm:$0xff] %v2268
        %s2285 = sand.u32 %s335, 1
        %s2286 = scalar_lea.sflag [#allocation3], %s2285
        %s2287 = sand.u32 %s335, 1
        %s2288 = smul.addr %s2287, 128
        %s2289 = scalar_lea.vmem [#allocation2], %s2288
        // Predicated region
        $region77: #{tpu_custom_call.1} parent=75 // pred_check
          %p2290 = pneg %p345
        $region78: #{tpu_custom_call.1} parent=75 // pred_check_branch
          %2292 = sbr.rel (%p2290) target = $region80
        $region79: #{tpu_custom_call.1} parent=75 // pred_region
          %s2294 = ssub.s32 2048, 2048
          %2295 = vsyncadd %s2286, %s2294
          %s2296 = smul.addr %s28, 16
          %s2297 = smul.addr %s2296, 128
          %s2298 = scalar_lea.hbm %s14, %s2297
          %s2299 = sshll.u32 %s2289, 4
          %s2300 = int_to_ptr.vmem [resolvable:$true] %s2299
          %2305 = dma.vmem_to_hbm [thread:$0]  %s2300, 2048, %s2298, %s2286, 256, 256, 16
        $region80: #{tpu_custom_call.1} parent=75 // pred_fallthru
          _
      $region76: #{tpu_custom_call.1} parent=5 // pred_fallthru
        _
      %p2306 = scmp.le.s32.totalorder 2, %s23
      // Predicated region
      $region81: #{tpu_custom_call.1} parent=5 // pred_check
        %p2307 = pneg %p2306
      $region82: #{tpu_custom_call.1} parent=5 // pred_check_branch
        %2309 = sbr.rel (%p2307) target = $region84
      $region83: #{tpu_custom_call.1} parent=5 // pred_region
        %s2310 = ssub.s32 %s23, 2
        // Predicated region
        $region85: #{tpu_custom_call.1} parent=83 // pred_check
          %p2311 = pneg %p351
        $region86: #{tpu_custom_call.1} parent=83 // pred_check_branch
          %2313 = sbr.rel (%p2311) target = $region88
        $region87: #{tpu_custom_call.1} parent=83 // pred_region
          %s2314 = sand.u32 %s336, 1
          %s2315 = scalar_lea.sflag [#allocation3], %s2314
          %s2316 = sand.u32 %s336, 1
          %s2317 = smul.addr %s2316, 128
          %s2318 = scalar_lea.vmem [#allocation2], %s2317
          %2319 = dma.done %s2315, 2048
        $region88: #{tpu_custom_call.1} parent=83 // pred_fallthru
          _
      $region84: #{tpu_custom_call.1} parent=5 // pred_fallthru
        _
    $region6: #{tpu_custom_call.1} parent=1 // loop_footer
      %s27 = sadd.s32 1, %s23
    $region7: #{tpu_custom_call.1} parent=1 // loop_footer_branch
      %22 = sbr.rel target = $region3
    $region8: #{tpu_custom_call.1} parent=1 // loop_exit
      _
    %2320 = vsyncpa [#allocation3], 1
    %s2321 = scalar_lea.sflag [#allocation3], 1
    %2322 = vsyncpa %s2321, 1

</llo_original>
